<compile_context>
chip_gen: v6e
topology: v6e:2x2x1
jax: 0.10.0
libtpu: 0.0.40
codegen_flags: <defaults>
</compile_context>

<pallas_src>
import functools

import jax
import jax.numpy as jnp
from jax.experimental import pallas as pl
from jax.experimental.pallas import tpu as pltpu


def _fused_block_kernel(x_ref, w_ref, coef_ref, hrow_ref, o_ref, *, H):
    """Fused RationalBasicBlock over the whole batch in a lane-dense layout.

    x_ref   : (N*H, W*C) f32   input slab (row = n*H + h, col = w*C + c)
    w_ref   : (2, 3, W*C, W*C) bf16 block-tridiagonal weights (stage, dy-tap)
    coef_ref: (14, W*C) f32    rows 0..3 BN1 scale/bias, BN2 scale/bias (folded),
                               rows 4..9 rational numerator a0..a5,
                               rows 10..13 rational denominator b0..b3
    hrow_ref: (N*H, 1) f32     within-image row index h for each slab row
    o_ref   : (N*H, W*C) f32   output slab
    """
    WC = x_ref.shape[1]
    x = x_ref[...]                                   # (NH, WC) f32: stage-1 input + residual

    coef = coef_ref[...]                             # (14, WC) f32, loaded once, reused by both stages
    s1, b1, s2, b2 = coef[0], coef[1], coef[2], coef[3]
    a0, a1, a2, a3, a4, a5 = coef[4], coef[5], coef[6], coef[7], coef[8], coef[9]
    r0, r1, r2, r3 = coef[10], coef[11], coef[12], coef[13]

    # Row-validity masks for the +-1 vertical taps (zero padding at the top/bottom of
    # every image, including the internal boundary between batch images).
    h = hrow_ref[...]                                # (NH, 1) f32
    mask_m1 = h >= 0.5                               # source row h-1 exists
    mask_p1 = h <= H - 1.5                           # source row h+1 exists

    zero_row = jnp.zeros((1, WC), jnp.float32)

    def conv3x3(z, stage):
        # Vertical taps: sublane-only row shifts (no lane shuffles, no im2col copies).
        z_m1 = jnp.where(mask_m1, jnp.concatenate([zero_row, z[:-1]], axis=0), 0.0)
        z_p1 = jnp.where(mask_p1, jnp.concatenate([z[1:], zero_row], axis=0), 0.0)
        # Horizontal taps + channel contraction live in the block-tridiagonal weights:
        # three (NH, WC) x (WC, WC) bf16 matmuls with f32 accumulation.
        acc = jnp.dot(z_m1.astype(jnp.bfloat16), w_ref[stage, 0],
                      preferred_element_type=jnp.float32)
        acc = acc + jnp.dot(z.astype(jnp.bfloat16), w_ref[stage, 1],
                            preferred_element_type=jnp.float32)
        acc = acc + jnp.dot(z_p1.astype(jnp.bfloat16), w_ref[stage, 2],
                            preferred_element_type=jnp.float32)
        return acc

    def rational(y):
        num = a0 + y * (a1 + y * (a2 + y * (a3 + y * (a4 + y * a5))))
        den = 1.0 + jnp.abs(y * (r0 + y * (r1 + y * (r2 + y * r3))))
        return num * pl.reciprocal(den, approx=True)

    # Stage 1: conv1 -> BN1 -> multi-variant rational (never leaves VMEM/vregs).
    act1 = rational(conv3x3(x, 0) * s1 + b1)
    # Stage 2: conv2 -> BN2 -> + identity shortcut -> multi-variant rational.
    y2 = conv3x3(act1, 1) * s2 + b2 + x
    o_ref[...] = rational(y2)


def _fold_bn(gamma, beta, mean, var, eps=1e-5):
    scale = gamma / jnp.sqrt(var + eps)
    bias = beta - mean * scale
    return scale, bias


def _per_channel_rational_coeffs(a_groups, b_groups, channels):
    """Expand (4, deg) group coefficients to per-channel (deg, C) tables."""
    cg = channels // 4
    a_pc = jnp.repeat(a_groups, cg, axis=0).T   # (6, C)
    b_pc = jnp.repeat(b_groups, cg, axis=0).T   # (4, C)
    return a_pc, b_pc


def _block_tridiag(w_hwio, W):
    """(3,3,Cin,Cout) HWIO -> (3, W*Cin, W*Cout) block-tridiagonal weight matrices.

    mat[ky][w_in*C + ci, w_out*C + co] = w[ky, w_in - w_out + 1, ci, co]  (SAME padding
    in the horizontal direction is handled by the missing off-diagonal blocks).
    """
    mats = []
    for ky in range(3):
        m = sum(jnp.kron(jnp.eye(W, k=1 - kx, dtype=w_hwio.dtype), w_hwio[ky, kx])
                for kx in range(3))
        mats.append(m)
    return jnp.stack(mats, axis=0)


def rational_basic_block(x_nchw, params):
    """Forward pass of RationalBasicBlock (stride=1, downsample=False)."""
    x = jnp.transpose(x_nchw, (0, 2, 3, 1)).astype(jnp.float32)    # NCHW -> NHWC
    N, H, W, C = x.shape
    assert C % 4 == 0, "multi-variant rational requires channels divisible by 4"
    NH, WC = N * H, W * C

    x2d = x.reshape(NH, WC)                                        # lane-dense slab

    scale1, bias1 = _fold_bn(*params["bn1"])
    scale2, bias2 = _fold_bn(*params["bn2"])
    a_pc, b_pc = _per_channel_rational_coeffs(params["rat_a"], params["rat_b"], C)

    # Per-channel tables tiled to the (w*C + c) column layout: (14, W*C).
    coef_c = jnp.concatenate(
        [scale1[None], bias1[None], scale2[None], bias2[None], a_pc, b_pc],
        axis=0).astype(jnp.float32)                                # (14, C)
    coef = jnp.tile(coef_c, (1, W))                                # (14, W*C)

    # Block-tridiagonal weights for both stages, bf16: (2, 3, W*C, W*C).
    w_packed = jnp.stack([_block_tridiag(params["w1"], W),
                          _block_tridiag(params["w2"], W)], axis=0).astype(jnp.bfloat16)

    # Within-image row index per slab row (for vertical-tap boundary masks).
    hrow = jnp.tile(jnp.arange(H, dtype=jnp.float32), N).reshape(NH, 1)

    kernel = functools.partial(_fused_block_kernel, H=H)
    out2d = pl.pallas_call(
        kernel,
        out_shape=jax.ShapeDtypeStruct((NH, WC), jnp.float32),
        grid_spec=pltpu.PrefetchScalarGridSpec(
            num_scalar_prefetch=0,
            grid=(1,),                                             # single step: whole batch
            in_specs=[
                pl.BlockSpec((NH, WC), lambda i: (0, 0)),
                pl.BlockSpec((2, 3, WC, WC), lambda i: (0, 0, 0, 0)),
                pl.BlockSpec((14, WC), lambda i: (0, 0)),
                pl.BlockSpec((NH, 1), lambda i: (0, 0)),
            ],
            out_specs=pl.BlockSpec((NH, WC), lambda i: (0, 0)),
        ),
        compiler_params=pltpu.CompilerParams(
            dimension_semantics=("arbitrary",)),
    )(x2d, w_packed, coef, hrow)

    out = out2d.reshape(N, H, W, C)
    return jnp.transpose(out, (0, 3, 1, 2))                        # NHWC -> NCHW


# ----------------------------- pure-JAX reference -----------------------------
def _reference(x_nchw, params):
    x = jnp.transpose(x_nchw, (0, 2, 3, 1)).astype(jnp.float32)
    C = x.shape[-1]
    scale1, bias1 = _fold_bn(*params["bn1"])
    scale2, bias2 = _fold_bn(*params["bn2"])
    a_pc, b_pc = _per_channel_rational_coeffs(params["rat_a"], params["rat_b"], C)

    def conv(inp, w):
        # bf16 operands / f32 accumulation to match the kernel's MXU precision.
        return jax.lax.conv_general_dilated(
            inp.astype(jnp.bfloat16), w.astype(jnp.bfloat16),
            window_strides=(1, 1), padding="SAME",
            dimension_numbers=("NHWC", "HWIO", "NHWC"),
            preferred_element_type=jnp.float32)

    def rational(y):
        num = a_pc[0] + y * (a_pc[1] + y * (a_pc[2] + y * (a_pc[3] + y * (a_pc[4] + y * a_pc[5]))))
        den = 1.0 + jnp.abs(y * (b_pc[0] + y * (b_pc[1] + y * (b_pc[2] + y * b_pc[3]))))
        return num / den

    o = conv(x, params["w1"]) * scale1 + bias1
    o = rational(o)
    o = conv(o, params["w2"]) * scale2 + bias2
    o = o + x
    o = rational(o)
    return jnp.transpose(o, (0, 3, 1, 2))


# ----------------------------------- main -------------------------------------
if __name__ == "__main__":
    key = jax.random.PRNGKey(0)
    N, C, H, W = 2, 16, 16, 16   # planes_in = planes_out = 16 (divisible by 4)

    ks = jax.random.split(key, 12)
    x = jax.random.normal(ks[0], (N, C, H, W), jnp.float32)

    params = {
        # conv weights stored HWIO for the NHWC kernel
        "w1": jax.random.normal(ks[1], (3, 3, C, C), jnp.float32) * 0.1,
        "w2": jax.random.normal(ks[2], (3, 3, C, C), jnp.float32) * 0.1,
        # bn = (gamma, beta, running_mean, running_var)
        "bn1": (1.0 + 0.2 * jax.random.normal(ks[3], (C,), jnp.float32),
                0.1 * jax.random.normal(ks[4], (C,), jnp.float32),
                0.1 * jax.random.normal(ks[5], (C,), jnp.float32),
                0.5 + jax.random.uniform(ks[6], (C,), jnp.float32)),
        "bn2": (1.0 + 0.2 * jax.random.normal(ks[7], (C,), jnp.float32),
                0.1 * jax.random.normal(ks[8], (C,), jnp.float32),
                0.1 * jax.random.normal(ks[9], (C,), jnp.float32),
                0.5 + jax.random.uniform(ks[10], (C,), jnp.float32)),
        # 4 rational variants (r/g/b/c): numerator deg 5 (6 coeffs), denom 4 coeffs
        "rat_a": 0.3 * jax.random.normal(ks[11], (4, 6), jnp.float32),
        "rat_b": 0.3 * jax.random.normal(jax.random.fold_in(key, 99), (4, 4), jnp.float32),
    }

    out = jax.block_until_ready(rational_basic_block(x, params))
    ref = jax.block_until_ready(_reference(x, params))

    assert out.shape == (N, C, H, W), out.shape
    err = jnp.max(jnp.abs(out - ref))
    scale = jnp.maximum(1.0, jnp.max(jnp.abs(ref)))
    rel = err / scale
    assert rel < 3e-2, f"relative error {rel} (abs {err})"
    print("KERNEL_OK")
</pallas_src>

<mosaic_0001>
module attributes {stable_mosaic.version = 11 : i64} {
  func.func @_fused_block_kernel(%arg0: i32, %arg1: memref<32x256xf32, #tpu.memory_space<vmem>>, %arg2: memref<2x3x256x256xbf16, #tpu.memory_space<vmem>>, %arg3: memref<14x256xf32, #tpu.memory_space<vmem>>, %arg4: memref<32x1xf32, #tpu.memory_space<vmem>>, %arg5: memref<32x256xf32, #tpu.memory_space<vmem>>) attributes {dimension_semantics = [#tpu.dimension_semantics<arbitrary>], iteration_bounds = array<i64: 1>, scalar_prefetch = 0 : i64, scratch_operands = 0 : i64, tpu.core_type = #tpu.core_type<tc>, window_params = [{pipeline_mode = #tpu.pipeline_mode<synchronous>, transform_indices = @transform_0, window_bounds = array<i64: 32, 256>}, {pipeline_mode = #tpu.pipeline_mode<synchronous>, transform_indices = @transform_1, window_bounds = array<i64: 2, 3, 256, 256>}, {pipeline_mode = #tpu.pipeline_mode<synchronous>, transform_indices = @transform_2, window_bounds = array<i64: 14, 256>}, {pipeline_mode = #tpu.pipeline_mode<synchronous>, transform_indices = @transform_3, window_bounds = array<i64: 32, 1>}, {pipeline_mode = #tpu.pipeline_mode<synchronous>, transform_indices = @transform_4, window_bounds = array<i64: 32, 256>}]} {
    %c0 = arith.constant 0 : index
    %c0_0 = arith.constant 0 : index
    %0 = vector.load %arg1[%c0, %c0_0] : memref<32x256xf32, #tpu.memory_space<vmem>>, vector<32x256xf32>
    %c0_1 = arith.constant 0 : index
    %c0_2 = arith.constant 0 : index
    %1 = vector.load %arg3[%c0_1, %c0_2] : memref<14x256xf32, #tpu.memory_space<vmem>>, vector<14x256xf32>
    %2 = vector.extract_strided_slice %1 {offsets = [0, 0], sizes = [1, 256], strides = [1, 1]} : vector<14x256xf32> to vector<1x256xf32>
    %3 = vector.shape_cast %2 : vector<1x256xf32> to vector<256xf32>
    %4 = vector.extract_strided_slice %1 {offsets = [1, 0], sizes = [1, 256], strides = [1, 1]} : vector<14x256xf32> to vector<1x256xf32>
    %5 = vector.shape_cast %4 : vector<1x256xf32> to vector<256xf32>
    %6 = vector.extract_strided_slice %1 {offsets = [2, 0], sizes = [1, 256], strides = [1, 1]} : vector<14x256xf32> to vector<1x256xf32>
    %7 = vector.shape_cast %6 : vector<1x256xf32> to vector<256xf32>
    %8 = vector.extract_strided_slice %1 {offsets = [3, 0], sizes = [1, 256], strides = [1, 1]} : vector<14x256xf32> to vector<1x256xf32>
    %9 = vector.shape_cast %8 : vector<1x256xf32> to vector<256xf32>
    %10 = vector.extract_strided_slice %1 {offsets = [4, 0], sizes = [1, 256], strides = [1, 1]} : vector<14x256xf32> to vector<1x256xf32>
    %11 = vector.shape_cast %10 : vector<1x256xf32> to vector<256xf32>
    %12 = vector.extract_strided_slice %1 {offsets = [5, 0], sizes = [1, 256], strides = [1, 1]} : vector<14x256xf32> to vector<1x256xf32>
    %13 = vector.shape_cast %12 : vector<1x256xf32> to vector<256xf32>
    %14 = vector.extract_strided_slice %1 {offsets = [6, 0], sizes = [1, 256], strides = [1, 1]} : vector<14x256xf32> to vector<1x256xf32>
    %15 = vector.shape_cast %14 : vector<1x256xf32> to vector<256xf32>
    %16 = vector.extract_strided_slice %1 {offsets = [7, 0], sizes = [1, 256], strides = [1, 1]} : vector<14x256xf32> to vector<1x256xf32>
    %17 = vector.shape_cast %16 : vector<1x256xf32> to vector<256xf32>
    %18 = vector.extract_strided_slice %1 {offsets = [8, 0], sizes = [1, 256], strides = [1, 1]} : vector<14x256xf32> to vector<1x256xf32>
    %19 = vector.shape_cast %18 : vector<1x256xf32> to vector<256xf32>
    %20 = vector.extract_strided_slice %1 {offsets = [9, 0], sizes = [1, 256], strides = [1, 1]} : vector<14x256xf32> to vector<1x256xf32>
    %21 = vector.shape_cast %20 : vector<1x256xf32> to vector<256xf32>
    %22 = vector.extract_strided_slice %1 {offsets = [10, 0], sizes = [1, 256], strides = [1, 1]} : vector<14x256xf32> to vector<1x256xf32>
    %23 = vector.shape_cast %22 : vector<1x256xf32> to vector<256xf32>
    %24 = vector.extract_strided_slice %1 {offsets = [11, 0], sizes = [1, 256], strides = [1, 1]} : vector<14x256xf32> to vector<1x256xf32>
    %25 = vector.shape_cast %24 : vector<1x256xf32> to vector<256xf32>
    %26 = vector.extract_strided_slice %1 {offsets = [12, 0], sizes = [1, 256], strides = [1, 1]} : vector<14x256xf32> to vector<1x256xf32>
    %27 = vector.shape_cast %26 : vector<1x256xf32> to vector<256xf32>
    %28 = vector.extract_strided_slice %1 {offsets = [13, 0], sizes = [1, 256], strides = [1, 1]} : vector<14x256xf32> to vector<1x256xf32>
    %29 = vector.shape_cast %28 : vector<1x256xf32> to vector<256xf32>
    %c0_3 = arith.constant 0 : index
    %c0_4 = arith.constant 0 : index
    %30 = vector.load %arg4[%c0_3, %c0_4] : memref<32x1xf32, #tpu.memory_space<vmem>>, vector<32x1xf32>
    %cst = arith.constant 5.000000e-01 : f32
    %31 = vector.broadcast %cst : f32 to vector<32x1xf32>
    %32 = arith.cmpf oge, %30, %31 : vector<32x1xf32>
    %cst_5 = arith.constant 1.450000e+01 : f32
    %33 = vector.broadcast %cst_5 : f32 to vector<32x1xf32>
    %34 = arith.cmpf ole, %30, %33 : vector<32x1xf32>
    %cst_6 = arith.constant 0.000000e+00 : f32
    %35 = vector.broadcast %cst_6 : f32 to vector<1x256xf32>
    %36 = vector.extract_strided_slice %0 {offsets = [0, 0], sizes = [31, 256], strides = [1, 1]} : vector<32x256xf32> to vector<31x256xf32>
    %37 = tpu.concatenate %35, %36 in 0 : vector<1x256xf32>, vector<31x256xf32> -> vector<32x256xf32>
    %cst_7 = arith.constant 0.000000e+00 : f32
    %38 = vector.shape_cast %32 : vector<32x1xi1> to vector<32x1xi1>
    %39 = vector.broadcast %38 : vector<32x1xi1> to vector<32x256xi1>
    %40 = vector.broadcast %cst_7 : f32 to vector<32x256xf32>
    %41 = arith.select %39, %37, %40 : vector<32x256xi1>, vector<32x256xf32>
    %42 = vector.extract_strided_slice %0 {offsets = [1, 0], sizes = [31, 256], strides = [1, 1]} : vector<32x256xf32> to vector<31x256xf32>
    %43 = tpu.concatenate %42, %35 in 0 : vector<31x256xf32>, vector<1x256xf32> -> vector<32x256xf32>
    %cst_8 = arith.constant 0.000000e+00 : f32
    %44 = vector.shape_cast %34 : vector<32x1xi1> to vector<32x1xi1>
    %45 = vector.broadcast %44 : vector<32x1xi1> to vector<32x256xi1>
    %46 = vector.broadcast %cst_8 : f32 to vector<32x256xf32>
    %47 = arith.select %45, %43, %46 : vector<32x256xi1>, vector<32x256xf32>
    %48 = arith.truncf %41 : vector<32x256xf32> to vector<32x256xbf16>
    %c0_9 = arith.constant 0 : index
    %c0_10 = arith.constant 0 : index
    %c0_11 = arith.constant 0 : index
    %c0_12 = arith.constant 0 : index
    %49 = vector.load %arg2[%c0_9, %c0_10, %c0_11, %c0_12] : memref<2x3x256x256xbf16, #tpu.memory_space<vmem>>, vector<1x1x256x256xbf16>
    %50 = vector.shape_cast %49 : vector<1x1x256x256xbf16> to vector<256x256xbf16>
    %cst_13 = arith.constant dense<0.000000e+00> : vector<32x256xf32>
    %51 = tpu.matmul %48, %50, %cst_13 {dimension_numbers = #tpu.dot_dimension_numbers<[1], [0], [0], [1], [0, 0, 1, 1], [], []>} : vector<32x256xbf16>, vector<256x256xbf16>, vector<32x256xf32> -> vector<32x256xf32>
    %52 = arith.truncf %0 : vector<32x256xf32> to vector<32x256xbf16>
    %c0_14 = arith.constant 0 : index
    %c1 = arith.constant 1 : index
    %c0_15 = arith.constant 0 : index
    %c0_16 = arith.constant 0 : index
    %53 = vector.load %arg2[%c0_14, %c1, %c0_15, %c0_16] : memref<2x3x256x256xbf16, #tpu.memory_space<vmem>>, vector<1x1x256x256xbf16>
    %54 = vector.shape_cast %53 : vector<1x1x256x256xbf16> to vector<256x256xbf16>
    %cst_17 = arith.constant dense<0.000000e+00> : vector<32x256xf32>
    %55 = tpu.matmul %52, %54, %cst_17 {dimension_numbers = #tpu.dot_dimension_numbers<[1], [0], [0], [1], [0, 0, 1, 1], [], []>} : vector<32x256xbf16>, vector<256x256xbf16>, vector<32x256xf32> -> vector<32x256xf32>
    %56 = arith.addf %51, %55 : vector<32x256xf32>
    %57 = arith.truncf %47 : vector<32x256xf32> to vector<32x256xbf16>
    %c0_18 = arith.constant 0 : index
    %c2 = arith.constant 2 : index
    %c0_19 = arith.constant 0 : index
    %c0_20 = arith.constant 0 : index
    %58 = vector.load %arg2[%c0_18, %c2, %c0_19, %c0_20] : memref<2x3x256x256xbf16, #tpu.memory_space<vmem>>, vector<1x1x256x256xbf16>
    %59 = vector.shape_cast %58 : vector<1x1x256x256xbf16> to vector<256x256xbf16>
    %cst_21 = arith.constant dense<0.000000e+00> : vector<32x256xf32>
    %60 = tpu.matmul %57, %59, %cst_21 {dimension_numbers = #tpu.dot_dimension_numbers<[1], [0], [0], [1], [0, 0, 1, 1], [], []>} : vector<32x256xbf16>, vector<256x256xbf16>, vector<32x256xf32> -> vector<32x256xf32>
    %61 = arith.addf %56, %60 : vector<32x256xf32>
    %62 = vector.shape_cast %3 : vector<256xf32> to vector<1x256xf32>
    %63 = vector.broadcast %62 : vector<1x256xf32> to vector<32x256xf32>
    %64 = arith.mulf %61, %63 : vector<32x256xf32>
    %65 = vector.shape_cast %5 : vector<256xf32> to vector<1x256xf32>
    %66 = vector.broadcast %65 : vector<1x256xf32> to vector<32x256xf32>
    %67 = arith.addf %64, %66 : vector<32x256xf32>
    %68 = vector.shape_cast %21 : vector<256xf32> to vector<1x256xf32>
    %69 = vector.broadcast %68 : vector<1x256xf32> to vector<32x256xf32>
    %70 = arith.mulf %67, %69 : vector<32x256xf32>
    %71 = vector.shape_cast %19 : vector<256xf32> to vector<1x256xf32>
    %72 = vector.broadcast %71 : vector<1x256xf32> to vector<32x256xf32>
    %73 = arith.addf %72, %70 : vector<32x256xf32>
    %74 = arith.mulf %67, %73 : vector<32x256xf32>
    %75 = vector.shape_cast %17 : vector<256xf32> to vector<1x256xf32>
    %76 = vector.broadcast %75 : vector<1x256xf32> to vector<32x256xf32>
    %77 = arith.addf %76, %74 : vector<32x256xf32>
    %78 = arith.mulf %67, %77 : vector<32x256xf32>
    %79 = vector.shape_cast %15 : vector<256xf32> to vector<1x256xf32>
    %80 = vector.broadcast %79 : vector<1x256xf32> to vector<32x256xf32>
    %81 = arith.addf %80, %78 : vector<32x256xf32>
    %82 = arith.mulf %67, %81 : vector<32x256xf32>
    %83 = vector.shape_cast %13 : vector<256xf32> to vector<1x256xf32>
    %84 = vector.broadcast %83 : vector<1x256xf32> to vector<32x256xf32>
    %85 = arith.addf %84, %82 : vector<32x256xf32>
    %86 = arith.mulf %67, %85 : vector<32x256xf32>
    %87 = vector.shape_cast %11 : vector<256xf32> to vector<1x256xf32>
    %88 = vector.broadcast %87 : vector<1x256xf32> to vector<32x256xf32>
    %89 = arith.addf %88, %86 : vector<32x256xf32>
    %90 = vector.shape_cast %29 : vector<256xf32> to vector<1x256xf32>
    %91 = vector.broadcast %90 : vector<1x256xf32> to vector<32x256xf32>
    %92 = arith.mulf %67, %91 : vector<32x256xf32>
    %93 = vector.shape_cast %27 : vector<256xf32> to vector<1x256xf32>
    %94 = vector.broadcast %93 : vector<1x256xf32> to vector<32x256xf32>
    %95 = arith.addf %94, %92 : vector<32x256xf32>
    %96 = arith.mulf %67, %95 : vector<32x256xf32>
    %97 = vector.shape_cast %25 : vector<256xf32> to vector<1x256xf32>
    %98 = vector.broadcast %97 : vector<1x256xf32> to vector<32x256xf32>
    %99 = arith.addf %98, %96 : vector<32x256xf32>
    %100 = arith.mulf %67, %99 : vector<32x256xf32>
    %101 = vector.shape_cast %23 : vector<256xf32> to vector<1x256xf32>
    %102 = vector.broadcast %101 : vector<1x256xf32> to vector<32x256xf32>
    %103 = arith.addf %102, %100 : vector<32x256xf32>
    %104 = arith.mulf %67, %103 : vector<32x256xf32>
    %105 = math.absf %104 : vector<32x256xf32>
    %cst_22 = arith.constant 1.000000e+00 : f32
    %106 = vector.broadcast %cst_22 : f32 to vector<32x256xf32>
    %107 = arith.addf %106, %105 : vector<32x256xf32>
    %108 = tpu.reciprocal %107 {approx = true} : vector<32x256xf32> -> vector<32x256xf32>
    %109 = arith.mulf %89, %108 : vector<32x256xf32>
    %110 = vector.extract_strided_slice %109 {offsets = [0, 0], sizes = [31, 256], strides = [1, 1]} : vector<32x256xf32> to vector<31x256xf32>
    %111 = tpu.concatenate %35, %110 in 0 : vector<1x256xf32>, vector<31x256xf32> -> vector<32x256xf32>
    %cst_23 = arith.constant 0.000000e+00 : f32
    %112 = vector.shape_cast %32 : vector<32x1xi1> to vector<32x1xi1>
    %113 = vector.broadcast %112 : vector<32x1xi1> to vector<32x256xi1>
    %114 = vector.broadcast %cst_23 : f32 to vector<32x256xf32>
    %115 = arith.select %113, %111, %114 : vector<32x256xi1>, vector<32x256xf32>
    %116 = vector.extract_strided_slice %109 {offsets = [1, 0], sizes = [31, 256], strides = [1, 1]} : vector<32x256xf32> to vector<31x256xf32>
    %117 = tpu.concatenate %116, %35 in 0 : vector<31x256xf32>, vector<1x256xf32> -> vector<32x256xf32>
    %cst_24 = arith.constant 0.000000e+00 : f32
    %118 = vector.shape_cast %34 : vector<32x1xi1> to vector<32x1xi1>
    %119 = vector.broadcast %118 : vector<32x1xi1> to vector<32x256xi1>
    %120 = vector.broadcast %cst_24 : f32 to vector<32x256xf32>
    %121 = arith.select %119, %117, %120 : vector<32x256xi1>, vector<32x256xf32>
    %122 = arith.truncf %115 : vector<32x256xf32> to vector<32x256xbf16>
    %c1_25 = arith.constant 1 : index
    %c0_26 = arith.constant 0 : index
    %c0_27 = arith.constant 0 : index
    %c0_28 = arith.constant 0 : index
    %123 = vector.load %arg2[%c1_25, %c0_26, %c0_27, %c0_28] : memref<2x3x256x256xbf16, #tpu.memory_space<vmem>>, vector<1x1x256x256xbf16>
    %124 = vector.shape_cast %123 : vector<1x1x256x256xbf16> to vector<256x256xbf16>
    %cst_29 = arith.constant dense<0.000000e+00> : vector<32x256xf32>
    %125 = tpu.matmul %122, %124, %cst_29 {dimension_numbers = #tpu.dot_dimension_numbers<[1], [0], [0], [1], [0, 0, 1, 1], [], []>} : vector<32x256xbf16>, vector<256x256xbf16>, vector<32x256xf32> -> vector<32x256xf32>
    %126 = arith.truncf %109 : vector<32x256xf32> to vector<32x256xbf16>
    %c1_30 = arith.constant 1 : index
    %c1_31 = arith.constant 1 : index
    %c0_32 = arith.constant 0 : index
    %c0_33 = arith.constant 0 : index
    %127 = vector.load %arg2[%c1_30, %c1_31, %c0_32, %c0_33] : memref<2x3x256x256xbf16, #tpu.memory_space<vmem>>, vector<1x1x256x256xbf16>
    %128 = vector.shape_cast %127 : vector<1x1x256x256xbf16> to vector<256x256xbf16>
    %cst_34 = arith.constant dense<0.000000e+00> : vector<32x256xf32>
    %129 = tpu.matmul %126, %128, %cst_34 {dimension_numbers = #tpu.dot_dimension_numbers<[1], [0], [0], [1], [0, 0, 1, 1], [], []>} : vector<32x256xbf16>, vector<256x256xbf16>, vector<32x256xf32> -> vector<32x256xf32>
    %130 = arith.addf %125, %129 : vector<32x256xf32>
    %131 = arith.truncf %121 : vector<32x256xf32> to vector<32x256xbf16>
    %c1_35 = arith.constant 1 : index
    %c2_36 = arith.constant 2 : index
    %c0_37 = arith.constant 0 : index
    %c0_38 = arith.constant 0 : index
    %132 = vector.load %arg2[%c1_35, %c2_36, %c0_37, %c0_38] : memref<2x3x256x256xbf16, #tpu.memory_space<vmem>>, vector<1x1x256x256xbf16>
    %133 = vector.shape_cast %132 : vector<1x1x256x256xbf16> to vector<256x256xbf16>
    %cst_39 = arith.constant dense<0.000000e+00> : vector<32x256xf32>
    %134 = tpu.matmul %131, %133, %cst_39 {dimension_numbers = #tpu.dot_dimension_numbers<[1], [0], [0], [1], [0, 0, 1, 1], [], []>} : vector<32x256xbf16>, vector<256x256xbf16>, vector<32x256xf32> -> vector<32x256xf32>
    %135 = arith.addf %130, %134 : vector<32x256xf32>
    %136 = vector.shape_cast %7 : vector<256xf32> to vector<1x256xf32>
    %137 = vector.broadcast %136 : vector<1x256xf32> to vector<32x256xf32>
    %138 = arith.mulf %135, %137 : vector<32x256xf32>
    %139 = vector.shape_cast %9 : vector<256xf32> to vector<1x256xf32>
    %140 = vector.broadcast %139 : vector<1x256xf32> to vector<32x256xf32>
    %141 = arith.addf %138, %140 : vector<32x256xf32>
    %142 = arith.addf %141, %0 : vector<32x256xf32>
    %143 = vector.shape_cast %21 : vector<256xf32> to vector<1x256xf32>
    %144 = vector.broadcast %143 : vector<1x256xf32> to vector<32x256xf32>
    %145 = arith.mulf %142, %144 : vector<32x256xf32>
    %146 = vector.shape_cast %19 : vector<256xf32> to vector<1x256xf32>
    %147 = vector.broadcast %146 : vector<1x256xf32> to vector<32x256xf32>
    %148 = arith.addf %147, %145 : vector<32x256xf32>
    %149 = arith.mulf %142, %148 : vector<32x256xf32>
    %150 = vector.shape_cast %17 : vector<256xf32> to vector<1x256xf32>
    %151 = vector.broadcast %150 : vector<1x256xf32> to vector<32x256xf32>
    %152 = arith.addf %151, %149 : vector<32x256xf32>
    %153 = arith.mulf %142, %152 : vector<32x256xf32>
    %154 = vector.shape_cast %15 : vector<256xf32> to vector<1x256xf32>
    %155 = vector.broadcast %154 : vector<1x256xf32> to vector<32x256xf32>
    %156 = arith.addf %155, %153 : vector<32x256xf32>
    %157 = arith.mulf %142, %156 : vector<32x256xf32>
    %158 = vector.shape_cast %13 : vector<256xf32> to vector<1x256xf32>
    %159 = vector.broadcast %158 : vector<1x256xf32> to vector<32x256xf32>
    %160 = arith.addf %159, %157 : vector<32x256xf32>
    %161 = arith.mulf %142, %160 : vector<32x256xf32>
    %162 = vector.shape_cast %11 : vector<256xf32> to vector<1x256xf32>
    %163 = vector.broadcast %162 : vector<1x256xf32> to vector<32x256xf32>
    %164 = arith.addf %163, %161 : vector<32x256xf32>
    %165 = vector.shape_cast %29 : vector<256xf32> to vector<1x256xf32>
    %166 = vector.broadcast %165 : vector<1x256xf32> to vector<32x256xf32>
    %167 = arith.mulf %142, %166 : vector<32x256xf32>
    %168 = vector.shape_cast %27 : vector<256xf32> to vector<1x256xf32>
    %169 = vector.broadcast %168 : vector<1x256xf32> to vector<32x256xf32>
    %170 = arith.addf %169, %167 : vector<32x256xf32>
    %171 = arith.mulf %142, %170 : vector<32x256xf32>
    %172 = vector.shape_cast %25 : vector<256xf32> to vector<1x256xf32>
    %173 = vector.broadcast %172 : vector<1x256xf32> to vector<32x256xf32>
    %174 = arith.addf %173, %171 : vector<32x256xf32>
    %175 = arith.mulf %142, %174 : vector<32x256xf32>
    %176 = vector.shape_cast %23 : vector<256xf32> to vector<1x256xf32>
    %177 = vector.broadcast %176 : vector<1x256xf32> to vector<32x256xf32>
    %178 = arith.addf %177, %175 : vector<32x256xf32>
    %179 = arith.mulf %142, %178 : vector<32x256xf32>
    %180 = math.absf %179 : vector<32x256xf32>
    %cst_40 = arith.constant 1.000000e+00 : f32
    %181 = vector.broadcast %cst_40 : f32 to vector<32x256xf32>
    %182 = arith.addf %181, %180 : vector<32x256xf32>
    %183 = tpu.reciprocal %182 {approx = true} : vector<32x256xf32> -> vector<32x256xf32>
    %184 = arith.mulf %164, %183 : vector<32x256xf32>
    %c0_41 = arith.constant 0 : index
    %c0_42 = arith.constant 0 : index
    %185 = vector.load %arg5[%c0_41, %c0_42] : memref<32x256xf32, #tpu.memory_space<vmem>>, vector<32x256xf32>
    tpu.vector_store %arg5[%c0_41, %c0_42], %184 {strides = array<i32>} : memref<32x256xf32, #tpu.memory_space<vmem>>, vector<32x256xf32>,
    return
  }
  func.func @transform_0(%arg0: i32) -> (i32, i32) {
    %c0_i32 = arith.constant 0 : i32
    %c0_i32_0 = arith.constant 0 : i32
    %c0_i32_1 = arith.constant 0 : i32
    return %c0_i32, %c0_i32_0 : i32, i32
  }
  func.func @transform_1(%arg0: i32) -> (i32, i32, i32, i32) {
    %c0_i32 = arith.constant 0 : i32
    %c0_i32_0 = arith.constant 0 : i32
    %c0_i32_1 = arith.constant 0 : i32
    %c0_i32_2 = arith.constant 0 : i32
    %c0_i32_3 = arith.constant 0 : i32
    return %c0_i32, %c0_i32_0, %c0_i32_1, %c0_i32_2 : i32, i32, i32, i32
  }
  func.func @transform_2(%arg0: i32) -> (i32, i32) {
    %c0_i32 = arith.constant 0 : i32
    %c0_i32_0 = arith.constant 0 : i32
    %c0_i32_1 = arith.constant 0 : i32
    return %c0_i32, %c0_i32_0 : i32, i32
  }
  func.func @transform_3(%arg0: i32) -> (i32, i32) {
    %c0_i32 = arith.constant 0 : i32
    %c0_i32_0 = arith.constant 0 : i32
    %c0_i32_1 = arith.constant 0 : i32
    return %c0_i32, %c0_i32_0 : i32, i32
  }
  func.func @transform_4(%arg0: i32) -> (i32, i32) {
    %c0_i32 = arith.constant 0 : i32
    %c0_i32_0 = arith.constant 0 : i32
    %c0_i32_1 = arith.constant 0 : i32
    return %c0_i32, %c0_i32_0 : i32, i32
  }
}

</mosaic_0001>

<llo_original>
// kernel: tpu_custom_call.1
$region0: #{tpu_custom_call.1}
  #allocation0 [shape = 'u32[]', space=smem, size = 0x4, offset = 0x4, fixed_abs, tag = 'smem constant byte address 0x4 - core index']
  #allocation1 [shape = 'u32[144,128]{1,0:T(1,128)}', space=vmem, size = 0x12000, scoped, tag = 'internal scratch']
  %s0 = inlined_call_operand.hbm [shape: f32[32,256], index: 0, kind: input, shape index: {}]
  %s1 = inlined_call_operand.hbm [shape: bf16[2,3,256,256], index: 1, kind: input, shape index: {}]
  %s2 = inlined_call_operand.vmem [shape: f32[14,256], index: 2, kind: input, shape index: {}]
  %s3 = inlined_call_operand.vmem [shape: f32[32,1], index: 3, kind: input, shape index: {}]
  %s4 = inlined_call_operand.hbm [shape: f32[32,256], index: 4, kind: output, shape index: {}]
  %s5 = sld [smem:[#allocation0]]
  $region34: #{tpu_custom_call.1} parent=0
    _
  %s7 = ssub.s32 1, %s5
  %s8 = scalar_select 0, %s7, %s5
  $region1: #{tpu_custom_call.1} parent=0
    #allocation2 [shape = 'u8[32768]{0}', space=vmem, size = 0x8000, scoped, tag = 'input window, operand 0, single buffered']
    #allocation3 [shape = 's32[1]{0}', space=sflag, size = 0x4, scoped, tag = 'scoped memory for tpu_custom_call.1']
    #allocation4 [shape = 's32[1]{0}', space=sflag, size = 0x4, scoped, tag = 'scoped memory for tpu_custom_call.1']
    #allocation5 [shape = 'u8[786432]{0}', space=vmem, size = 0xc0000, scoped, tag = 'input window, operand 1, single buffered']
    #allocation6 [shape = 's32[1]{0}', space=sflag, size = 0x4, scoped, tag = 'scoped memory for tpu_custom_call.1']
    #allocation7 [shape = 'u8[32768]{0}', space=vmem, size = 0x8000, scoped, tag = 'output window, operand 0, single buffered']
    %9 = vsyncpa [#allocation3], 0
    %10 = vsyncpa [#allocation6], 0
    %11 = vsyncpa [#allocation4], 0
    // Predicated region
    $region2: #{tpu_custom_call.1} parent=1 // pred_check
      _
    $region3: #{tpu_custom_call.1} parent=1 // pred_check_branch
      %13 = sbr.rel (0) target = $region5
    $region4: #{tpu_custom_call.1} parent=1 // pred_region
      %s15 = ssub.s32 1024, 1024
      %16 = vsyncadd [#allocation3], %s15
      %s17 = sshll.u32 [#allocation2], 4
      %s18 = int_to_ptr.vmem [resolvable:$true] %s17
      %23 = dma.hbm_to_vmem [thread:$0]  %s0, 1024, %s18, [#allocation3], 256, 256, 16
    $region5: #{tpu_custom_call.1} parent=1 // pred_fallthru
      _
    // Predicated region
    $region6: #{tpu_custom_call.1} parent=1 // pred_check
      _
    $region7: #{tpu_custom_call.1} parent=1 // pred_check_branch
      %25 = sbr.rel (0) target = $region9
    $region8: #{tpu_custom_call.1} parent=1 // pred_region
      %s27 = ssub.s32 24576, 24576
      %28 = vsyncadd [#allocation6], %s27
      %s29 = sshll.u32 [#allocation5], 4
      %s30 = int_to_ptr.vmem [resolvable:$true] %s29
      %35 = dma.hbm_to_vmem [thread:$0]  %s1, 24576, %s30, [#allocation6], 128, 128, 8
    $region9: #{tpu_custom_call.1} parent=1 // pred_fallthru
      _
    // Predicated region
    $region10: #{tpu_custom_call.1} parent=1 // pred_check
      _
    $region11: #{tpu_custom_call.1} parent=1 // pred_check_branch
      %37 = sbr.rel (0) target = $region13
    $region12: #{tpu_custom_call.1} parent=1 // pred_region
      _
    $region13: #{tpu_custom_call.1} parent=1 // pred_fallthru
      _
    // Predicated region
    $region14: #{tpu_custom_call.1} parent=1 // pred_check
      _
    $region15: #{tpu_custom_call.1} parent=1 // pred_check_branch
      %39 = sbr.rel (0) target = $region17
    $region16: #{tpu_custom_call.1} parent=1 // pred_region
      _
    $region17: #{tpu_custom_call.1} parent=1 // pred_fallthru
      _
    // Predicated region
    $region18: #{tpu_custom_call.1} parent=1 // pred_check
      _
    $region19: #{tpu_custom_call.1} parent=1 // pred_check_branch
      %41 = sbr.rel (0) target = $region21
    $region20: #{tpu_custom_call.1} parent=1 // pred_region
      %42 = dma.done [#allocation3], 1024
    $region21: #{tpu_custom_call.1} parent=1 // pred_fallthru
      _
    // Predicated region
    $region22: #{tpu_custom_call.1} parent=1 // pred_check
      _
    $region23: #{tpu_custom_call.1} parent=1 // pred_check_branch
      %44 = sbr.rel (0) target = $region25
    $region24: #{tpu_custom_call.1} parent=1 // pred_region
      %45 = dma.done [#allocation6], 24576
    $region25: #{tpu_custom_call.1} parent=1 // pred_fallthru
      _
    %v46 = vld [vmem:[#allocation2] sm:$0xff]
    %v47 = vld [vmem:[#allocation2 + $0x8] sm:$0xff]
    %v48 = vld [vmem:[#allocation2 + $0x10] sm:$0xff]
    %v49 = vld [vmem:[#allocation2 + $0x18] sm:$0xff]
    %v50 = vld [vmem:[#allocation2 + $0x20] sm:$0xff]
    %v51 = vld [vmem:[#allocation2 + $0x28] sm:$0xff]
    %v52 = vld [vmem:[#allocation2 + $0x30] sm:$0xff]
    %v53 = vld [vmem:[#allocation2 + $0x38] sm:$0xff]
    %v54 = vld [vmem:[%s2] sm:$0xff]
    %v55 = vld [vmem:[%s2 + $0x8] sm:$0xff]
    %v56 = vld [vmem:[%s2 + $0x10] sm:$0x3f]
    %v57 = vld [vmem:[%s2 + $0x18] sm:$0x3f]
    %v58 = vld [vmem:[%s3] sm:$0xff]
    %v59 = vld [vmem:[%s3 + $0x8] sm:$0xff]
    %v60 = vld [vmem:[%s3 + $0x10] sm:$0xff]
    %v61 = vld [vmem:[%s3 + $0x18] sm:$0xff]
    %vm62 = vcmp.ge.f32.partialorder %v58, 0.5
    %vm63 = vcmp.ge.f32.partialorder %v59, 0.5
    %vm64 = vcmp.ge.f32.partialorder %v60, 0.5
    %vm65 = vcmp.ge.f32.partialorder %v61, 0.5
    %vm66 = vcmp.le.f32.partialorder %v58, 14.5
    %vm67 = vcmp.le.f32.partialorder %v59, 14.5
    %vm68 = vcmp.le.f32.partialorder %v60, 14.5
    %vm69 = vcmp.le.f32.partialorder %v61, 14.5
    %vm78 = vcmask 1040384
    %v79 = vrot.slane %v46, 7
    %v80 = vrot.slane %v47, 7
    %v81 = vrot.slane %v48, 7
    %v82 = vsel %vm78, %v79, %v81
    %v83 = vrot.slane %v49, 7
    %v84 = vsel %vm78, %v80, %v83
    %v85 = vrot.slane %v50, 7
    %v86 = vsel %vm78, %v81, %v85
    %v87 = vrot.slane %v51, 7
    %v88 = vsel %vm78, %v83, %v87
    %v89 = vrot.slane %v52, 7
    %v90 = vsel %vm78, %v85, %v89
    %v91 = vrot.slane %v53, 7
    %v92 = vsel %vm78, %v87, %v91
    %v101 = vsel %vm78, 0.0, %v79
    %v102 = vsel %vm78, 0.0, %v80
    %v103 = vsel %vm62, 1, 0
    %v104 = vsel %vm63, 1, 0
    %v105 = vsel %vm64, 1, 0
    %v106 = vsel %vm65, 1, 0
    %107 = vset.pattern.permute.xlu0 0
    %108 = vperm.xlu0 %107, %v103
    %v109 = vpop.permute.xlu0 %108
    %110 = vset.pattern.permute.xlu0 0
    %111 = vperm.xlu0 %110, %v104
    %v112 = vpop.permute.xlu0 %111
    %113 = vset.pattern.permute.xlu0 0
    %114 = vperm.xlu0 %113, %v105
    %v115 = vpop.permute.xlu0 %114
    %116 = vset.pattern.permute.xlu0 0
    %117 = vperm.xlu0 %116, %v106
    %v118 = vpop.permute.xlu0 %117
    %vm119 = vcmp.eq.s32.totalorder %v109, 1
    %vm120 = vcmp.eq.s32.totalorder %v112, 1
    %vm121 = vcmp.eq.s32.totalorder %v115, 1
    %vm122 = vcmp.eq.s32.totalorder %v118, 1
    %v123 = vsel %vm119, %v101, 0.0
    %v124 = vsel %vm119, %v102, 0.0
    %v125 = vsel %vm120, %v82, 0.0
    %v126 = vsel %vm120, %v84, 0.0
    %v127 = vsel %vm121, %v86, 0.0
    %v128 = vsel %vm121, %v88, 0.0
    %v129 = vsel %vm122, %v90, 0.0
    %v130 = vsel %vm122, %v92, 0.0
    %vm131 = vcmask 1046528
    %v132 = vrot.slane %v46, 1
    %v133 = vrot.slane %v48, 1
    %v134 = vsel %vm131, %v132, %v133
    %v135 = vrot.slane %v47, 1
    %v136 = vrot.slane %v49, 1
    %v137 = vsel %vm131, %v135, %v136
    %v138 = vrot.slane %v50, 1
    %v139 = vsel %vm131, %v133, %v138
    %v140 = vrot.slane %v51, 1
    %v141 = vsel %vm131, %v136, %v140
    %v142 = vrot.slane %v52, 1
    %v143 = vsel %vm131, %v138, %v142
    %v144 = vrot.slane %v53, 1
    %v145 = vsel %vm131, %v140, %v144
    %v154 = vsel %vm131, %v142, 0.0
    %v155 = vsel %vm131, %v144, 0.0
    %v156 = vsel %vm66, 1, 0
    %v157 = vsel %vm67, 1, 0
    %v158 = vsel %vm68, 1, 0
    %v159 = vsel %vm69, 1, 0
    %160 = vset.pattern.permute.xlu0 0
    %161 = vperm.xlu0 %160, %v156
    %v162 = vpop.permute.xlu0 %161
    %163 = vset.pattern.permute.xlu0 0
    %164 = vperm.xlu0 %163, %v157
    %v165 = vpop.permute.xlu0 %164
    %166 = vset.pattern.permute.xlu0 0
    %167 = vperm.xlu0 %166, %v158
    %v168 = vpop.permute.xlu0 %167
    %169 = vset.pattern.permute.xlu0 0
    %170 = vperm.xlu0 %169, %v159
    %v171 = vpop.permute.xlu0 %170
    %vm172 = vcmp.eq.s32.totalorder %v162, 1
    %vm173 = vcmp.eq.s32.totalorder %v165, 1
    %vm174 = vcmp.eq.s32.totalorder %v168, 1
    %vm175 = vcmp.eq.s32.totalorder %v171, 1
    %v176 = vsel %vm172, %v134, 0.0
    %v177 = vsel %vm172, %v137, 0.0
    %v178 = vsel %vm173, %v139, 0.0
    %v179 = vsel %vm173, %v141, 0.0
    %v180 = vsel %vm174, %v143, 0.0
    %v181 = vsel %vm174, %v145, 0.0
    %v182 = vsel %vm175, %v154, 0.0
    %v183 = vsel %vm175, %v155, 0.0
    %v184 = vpack.c.bf16 %v125, %v123
    %v185 = vpack.c.bf16 %v126, %v124
    %v186 = vpack.c.bf16 %v129, %v127
    %v187 = vpack.c.bf16 %v130, %v128
    %v188 = vld [vmem:[#allocation5] sm:$0xff]
    %v189 = vld [vmem:[#allocation5 + $0x8] sm:$0xff]
    %v190 = vld [vmem:[#allocation5 + $0x10] sm:$0xff]
    %v191 = vld [vmem:[#allocation5 + $0x18] sm:$0xff]
    %v192 = vld [vmem:[#allocation5 + $0x20] sm:$0xff]
    %v193 = vld [vmem:[#allocation5 + $0x28] sm:$0xff]
    %v194 = vld [vmem:[#allocation5 + $0x30] sm:$0xff]
    %v195 = vld [vmem:[#allocation5 + $0x38] sm:$0xff]
    %v196 = vld [vmem:[#allocation5 + $0x40] sm:$0xff]
    %v197 = vld [vmem:[#allocation5 + $0x48] sm:$0xff]
    %v198 = vld [vmem:[#allocation5 + $0x50] sm:$0xff]
    %v199 = vld [vmem:[#allocation5 + $0x58] sm:$0xff]
    %v200 = vld [vmem:[#allocation5 + $0x60] sm:$0xff]
    %v201 = vld [vmem:[#allocation5 + $0x68] sm:$0xff]
    %v202 = vld [vmem:[#allocation5 + $0x70] sm:$0xff]
    %v203 = vld [vmem:[#allocation5 + $0x78] sm:$0xff]
    %v204 = vld [vmem:[#allocation5 + $0x80] sm:$0xff]
    %v205 = vld [vmem:[#allocation5 + $0x88] sm:$0xff]
    %v206 = vld [vmem:[#allocation5 + $0x90] sm:$0xff]
    %v207 = vld [vmem:[#allocation5 + $0x98] sm:$0xff]
    %v208 = vld [vmem:[#allocation5 + $0xa0] sm:$0xff]
    %v209 = vld [vmem:[#allocation5 + $0xa8] sm:$0xff]
    %v210 = vld [vmem:[#allocation5 + $0xb0] sm:$0xff]
    %v211 = vld [vmem:[#allocation5 + $0xb8] sm:$0xff]
    %v212 = vld [vmem:[#allocation5 + $0xc0] sm:$0xff]
    %v213 = vld [vmem:[#allocation5 + $0xc8] sm:$0xff]
    %v214 = vld [vmem:[#allocation5 + $0xd0] sm:$0xff]
    %v215 = vld [vmem:[#allocation5 + $0xd8] sm:$0xff]
    %v216 = vld [vmem:[#allocation5 + $0xe0] sm:$0xff]
    %v217 = vld [vmem:[#allocation5 + $0xe8] sm:$0xff]
    %v218 = vld [vmem:[#allocation5 + $0xf0] sm:$0xff]
    %v219 = vld [vmem:[#allocation5 + $0xf8] sm:$0xff]
    %v220 = vpack.c.bf16 %v48, %v46
    %v221 = vpack.c.bf16 %v49, %v47
    %v222 = vpack.c.bf16 %v52, %v50
    %v223 = vpack.c.bf16 %v53, %v51
    %s224 = scalar_lea.vmem [#allocation5], 256
    %v225 = vld [vmem:[%s224] sm:$0xff]
    %v226 = vld [vmem:[%s224 + $0x8] sm:$0xff]
    %v227 = vld [vmem:[%s224 + $0x10] sm:$0xff]
    %v228 = vld [vmem:[%s224 + $0x18] sm:$0xff]
    %v229 = vld [vmem:[%s224 + $0x20] sm:$0xff]
    %v230 = vld [vmem:[%s224 + $0x28] sm:$0xff]
    %v231 = vld [vmem:[%s224 + $0x30] sm:$0xff]
    %v232 = vld [vmem:[%s224 + $0x38] sm:$0xff]
    %v233 = vld [vmem:[%s224 + $0x40] sm:$0xff]
    %v234 = vld [vmem:[%s224 + $0x48] sm:$0xff]
    %v235 = vld [vmem:[%s224 + $0x50] sm:$0xff]
    %v236 = vld [vmem:[%s224 + $0x58] sm:$0xff]
    %v237 = vld [vmem:[%s224 + $0x60] sm:$0xff]
    %v238 = vld [vmem:[%s224 + $0x68] sm:$0xff]
    %v239 = vld [vmem:[%s224 + $0x70] sm:$0xff]
    %v240 = vld [vmem:[%s224 + $0x78] sm:$0xff]
    %v241 = vld [vmem:[%s224 + $0x80] sm:$0xff]
    %v242 = vld [vmem:[%s224 + $0x88] sm:$0xff]
    %v243 = vld [vmem:[%s224 + $0x90] sm:$0xff]
    %v244 = vld [vmem:[%s224 + $0x98] sm:$0xff]
    %v245 = vld [vmem:[%s224 + $0xa0] sm:$0xff]
    %v246 = vld [vmem:[%s224 + $0xa8] sm:$0xff]
    %v247 = vld [vmem:[%s224 + $0xb0] sm:$0xff]
    %v248 = vld [vmem:[%s224 + $0xb8] sm:$0xff]
    %v249 = vld [vmem:[%s224 + $0xc0] sm:$0xff]
    %v250 = vld [vmem:[%s224 + $0xc8] sm:$0xff]
    %v251 = vld [vmem:[%s224 + $0xd0] sm:$0xff]
    %v252 = vld [vmem:[%s224 + $0xd8] sm:$0xff]
    %v253 = vld [vmem:[%s224 + $0xe0] sm:$0xff]
    %v254 = vld [vmem:[%s224 + $0xe8] sm:$0xff]
    %v255 = vld [vmem:[%s224 + $0xf0] sm:$0xff]
    %v256 = vld [vmem:[%s224 + $0xf8] sm:$0xff]
    %v289 = vunpack.c.l.b16 %v225
    %v290 = vunpack.c.h.b16 %v225
    %v291 = vunpack.c.l.b16 %v226
    %v292 = vunpack.c.h.b16 %v226
    %v293 = vunpack.c.l.b16 %v227
    %v294 = vunpack.c.h.b16 %v227
    %v295 = vunpack.c.l.b16 %v228
    %v296 = vunpack.c.h.b16 %v228
    %v297 = vunpack.c.l.b16 %v229
    %v298 = vunpack.c.h.b16 %v229
    %v299 = vunpack.c.l.b16 %v230
    %v300 = vunpack.c.h.b16 %v230
    %v301 = vunpack.c.l.b16 %v231
    %v302 = vunpack.c.h.b16 %v231
    %v303 = vunpack.c.l.b16 %v232
    %v304 = vunpack.c.h.b16 %v232
    %v305 = vunpack.c.l.b16 %v233
    %v306 = vunpack.c.h.b16 %v233
    %v307 = vunpack.c.l.b16 %v234
    %v308 = vunpack.c.h.b16 %v234
    %v309 = vunpack.c.l.b16 %v235
    %v310 = vunpack.c.h.b16 %v235
    %v311 = vunpack.c.l.b16 %v236
    %v312 = vunpack.c.h.b16 %v236
    %v313 = vunpack.c.l.b16 %v237
    %v314 = vunpack.c.h.b16 %v237
    %v315 = vunpack.c.l.b16 %v238
    %v316 = vunpack.c.h.b16 %v238
    %v317 = vunpack.c.l.b16 %v239
    %v318 = vunpack.c.h.b16 %v239
    %v319 = vunpack.c.l.b16 %v240
    %v320 = vunpack.c.h.b16 %v240
    %v321 = vunpack.c.l.b16 %v241
    %v322 = vunpack.c.h.b16 %v241
    %v323 = vunpack.c.l.b16 %v242
    %v324 = vunpack.c.h.b16 %v242
    %v325 = vunpack.c.l.b16 %v243
    %v326 = vunpack.c.h.b16 %v243
    %v327 = vunpack.c.l.b16 %v244
    %v328 = vunpack.c.h.b16 %v244
    %v329 = vunpack.c.l.b16 %v245
    %v330 = vunpack.c.h.b16 %v245
    %v331 = vunpack.c.l.b16 %v246
    %v332 = vunpack.c.h.b16 %v246
    %v333 = vunpack.c.l.b16 %v247
    %v334 = vunpack.c.h.b16 %v247
    %v335 = vunpack.c.l.b16 %v248
    %v336 = vunpack.c.h.b16 %v248
    %v337 = vunpack.c.l.b16 %v249
    %v338 = vunpack.c.h.b16 %v249
    %v339 = vunpack.c.l.b16 %v250
    %v340 = vunpack.c.h.b16 %v250
    %v341 = vunpack.c.l.b16 %v251
    %v342 = vunpack.c.h.b16 %v251
    %v343 = vunpack.c.l.b16 %v252
    %v344 = vunpack.c.h.b16 %v252
    %v345 = vunpack.c.l.b16 %v253
    %v346 = vunpack.c.h.b16 %v253
    %v347 = vunpack.c.l.b16 %v254
    %v348 = vunpack.c.h.b16 %v254
    %v349 = vunpack.c.l.b16 %v255
    %v350 = vunpack.c.h.b16 %v255
    %v351 = vunpack.c.l.b16 %v256
    %v352 = vunpack.c.h.b16 %v256
    %v353 = vpack.c.b16 %v291, %v289
    %v354 = vpack.c.b16 %v292, %v290
    %v355 = vpack.c.b16 %v295, %v293
    %v356 = vpack.c.b16 %v296, %v294
    %v357 = vpack.c.b16 %v299, %v297
    %v358 = vpack.c.b16 %v300, %v298
    %v359 = vpack.c.b16 %v303, %v301
    %v360 = vpack.c.b16 %v304, %v302
    %v361 = vpack.c.b16 %v307, %v305
    %v362 = vpack.c.b16 %v308, %v306
    %v363 = vpack.c.b16 %v311, %v309
    %v364 = vpack.c.b16 %v312, %v310
    %v365 = vpack.c.b16 %v315, %v313
    %v366 = vpack.c.b16 %v316, %v314
    %v367 = vpack.c.b16 %v319, %v317
    %v368 = vpack.c.b16 %v320, %v318
    %v369 = vpack.c.b16 %v323, %v321
    %v370 = vpack.c.b16 %v324, %v322
    %v371 = vpack.c.b16 %v327, %v325
    %v372 = vpack.c.b16 %v328, %v326
    %v373 = vpack.c.b16 %v331, %v329
    %v374 = vpack.c.b16 %v332, %v330
    %v375 = vpack.c.b16 %v335, %v333
    %v376 = vpack.c.b16 %v336, %v334
    %v377 = vpack.c.b16 %v339, %v337
    %v378 = vpack.c.b16 %v340, %v338
    %v379 = vpack.c.b16 %v343, %v341
    %v380 = vpack.c.b16 %v344, %v342
    %v381 = vpack.c.b16 %v347, %v345
    %v382 = vpack.c.b16 %v348, %v346
    %v383 = vpack.c.b16 %v351, %v349
    %v384 = vpack.c.b16 %v352, %v350
    %417 = vmatprep.subr.bf16.mxu0 %v368
    %418 = vmatpush1.bf16.msra.mxu0 %v367
    %419 = vmatprep.subr.bf16.mxu0 %v366
    %420 = vmatpush1.bf16.msra.mxu0 %v365
    %421 = vmatprep.subr.bf16.mxu0 %v364
    %422 = vmatpush1.bf16.msra.mxu0 %v363
    %423 = vmatprep.subr.bf16.mxu0 %v362
    %424 = vmatpush1.bf16.msra.mxu0 %v361
    %425 = vmatprep.subr.bf16.mxu0 %v360
    %426 = vmatpush1.bf16.msra.mxu0 %v359
    %427 = vmatprep.subr.bf16.mxu0 %v358
    %428 = vmatpush1.bf16.msra.mxu0 %v357
    %429 = vmatprep.subr.bf16.mxu0 %v356
    %430 = vmatpush1.bf16.msra.mxu0 %v355
    %431 = vmatprep.subr.bf16.mxu0 %v354
    %432 = vmatpush1.bf16.msra.mxu0 %v353
    %433 = vmatprep.subr.bf16.mxu0 %v384
    %434 = vmatpush2.bf16.msra.mxu0 %v383
    %435 = vmatprep.subr.bf16.mxu0 %v382
    %436 = vmatpush2.bf16.msra.mxu0 %v381
    %437 = vmatprep.subr.bf16.mxu0 %v380
    %438 = vmatpush2.bf16.msra.mxu0 %v379
    %439 = vmatprep.subr.bf16.mxu0 %v378
    %440 = vmatpush2.bf16.msra.mxu0 %v377
    %441 = vmatprep.subr.bf16.mxu0 %v376
    %442 = vmatpush2.bf16.msra.mxu0 %v375
    %443 = vmatprep.subr.bf16.mxu0 %v374
    %444 = vmatpush2.bf16.msra.mxu0 %v373
    %445 = vmatprep.subr.bf16.mxu0 %v372
    %446 = vmatpush2.bf16.msra.mxu0 %v371
    %447 = vmatprep.subr.bf16.mxu0 %v370
    %448 = vmatpush2.bf16.msra.mxu0 %v369
    %449 = vmatprep.mubr.bf16.mxu0 %v221
    %450 = vmatmul.mubr.bf16.gmra.mxu0 %v220
    %v451 = vpop.f32.mrf.mxu0
    %v452 = vadd.f32 0.0, %v451
    %v453 = vpop.f32.mrf.mxu0
    %v454 = vadd.f32 0.0, %v453
    %v455 = vpop.f32.mrf.mxu0
    %v456 = vadd.f32 0.0, %v455
    %v457 = vpop.f32.mrf.mxu0
    %v458 = vadd.f32 0.0, %v457
    %459 = vmatprep.mubr.bf16.mxu0 %v223
    %460 = vmatmul.mubr.bf16.gmra.mxu0 %v222
    %v461 = vpop.f32.mrf.mxu0
    %v462 = vadd.f32 0.0, %v461
    %v463 = vpop.f32.mrf.mxu0
    %v464 = vadd.f32 0.0, %v463
    %v465 = vpop.f32.mrf.mxu0
    %v466 = vadd.f32 0.0, %v465
    %v467 = vpop.f32.mrf.mxu0
    %v468 = vadd.f32 0.0, %v467
    %469 = vdwg.mxu0
    %v502 = vunpack.c.l.b16 %v188
    %v503 = vunpack.c.h.b16 %v188
    %v504 = vunpack.c.l.b16 %v189
    %v505 = vunpack.c.h.b16 %v189
    %v506 = vunpack.c.l.b16 %v190
    %v507 = vunpack.c.h.b16 %v190
    %v508 = vunpack.c.l.b16 %v191
    %v509 = vunpack.c.h.b16 %v191
    %v510 = vunpack.c.l.b16 %v192
    %v511 = vunpack.c.h.b16 %v192
    %v512 = vunpack.c.l.b16 %v193
    %v513 = vunpack.c.h.b16 %v193
    %v514 = vunpack.c.l.b16 %v194
    %v515 = vunpack.c.h.b16 %v194
    %v516 = vunpack.c.l.b16 %v195
    %v517 = vunpack.c.h.b16 %v195
    %v518 = vunpack.c.l.b16 %v196
    %v519 = vunpack.c.h.b16 %v196
    %v520 = vunpack.c.l.b16 %v197
    %v521 = vunpack.c.h.b16 %v197
    %v522 = vunpack.c.l.b16 %v198
    %v523 = vunpack.c.h.b16 %v198
    %v524 = vunpack.c.l.b16 %v199
    %v525 = vunpack.c.h.b16 %v199
    %v526 = vunpack.c.l.b16 %v200
    %v527 = vunpack.c.h.b16 %v200
    %v528 = vunpack.c.l.b16 %v201
    %v529 = vunpack.c.h.b16 %v201
    %v530 = vunpack.c.l.b16 %v202
    %v531 = vunpack.c.h.b16 %v202
    %v532 = vunpack.c.l.b16 %v203
    %v533 = vunpack.c.h.b16 %v203
    %v534 = vunpack.c.l.b16 %v204
    %v535 = vunpack.c.h.b16 %v204
    %v536 = vunpack.c.l.b16 %v205
    %v537 = vunpack.c.h.b16 %v205
    %v538 = vunpack.c.l.b16 %v206
    %v539 = vunpack.c.h.b16 %v206
    %v540 = vunpack.c.l.b16 %v207
    %v541 = vunpack.c.h.b16 %v207
    %v542 = vunpack.c.l.b16 %v208
    %v543 = vunpack.c.h.b16 %v208
    %v544 = vunpack.c.l.b16 %v209
    %v545 = vunpack.c.h.b16 %v209
    %v546 = vunpack.c.l.b16 %v210
    %v547 = vunpack.c.h.b16 %v210
    %v548 = vunpack.c.l.b16 %v211
    %v549 = vunpack.c.h.b16 %v211
    %v550 = vunpack.c.l.b16 %v212
    %v551 = vunpack.c.h.b16 %v212
    %v552 = vunpack.c.l.b16 %v213
    %v553 = vunpack.c.h.b16 %v213
    %v554 = vunpack.c.l.b16 %v214
    %v555 = vunpack.c.h.b16 %v214
    %v556 = vunpack.c.l.b16 %v215
    %v557 = vunpack.c.h.b16 %v215
    %v558 = vunpack.c.l.b16 %v216
    %v559 = vunpack.c.h.b16 %v216
    %v560 = vunpack.c.l.b16 %v217
    %v561 = vunpack.c.h.b16 %v217
    %v562 = vunpack.c.l.b16 %v218
    %v563 = vunpack.c.h.b16 %v218
    %v564 = vunpack.c.l.b16 %v219
    %v565 = vunpack.c.h.b16 %v219
    %v566 = vpack.c.b16 %v504, %v502
    %v567 = vpack.c.b16 %v505, %v503
    %v568 = vpack.c.b16 %v508, %v506
    %v569 = vpack.c.b16 %v509, %v507
    %v570 = vpack.c.b16 %v512, %v510
    %v571 = vpack.c.b16 %v513, %v511
    %v572 = vpack.c.b16 %v516, %v514
    %v573 = vpack.c.b16 %v517, %v515
    %v574 = vpack.c.b16 %v520, %v518
    %v575 = vpack.c.b16 %v521, %v519
    %v576 = vpack.c.b16 %v524, %v522
    %v577 = vpack.c.b16 %v525, %v523
    %v578 = vpack.c.b16 %v528, %v526
    %v579 = vpack.c.b16 %v529, %v527
    %v580 = vpack.c.b16 %v532, %v530
    %v581 = vpack.c.b16 %v533, %v531
    %v582 = vpack.c.b16 %v536, %v534
    %v583 = vpack.c.b16 %v537, %v535
    %v584 = vpack.c.b16 %v540, %v538
    %v585 = vpack.c.b16 %v541, %v539
    %v586 = vpack.c.b16 %v544, %v542
    %v587 = vpack.c.b16 %v545, %v543
    %v588 = vpack.c.b16 %v548, %v546
    %v589 = vpack.c.b16 %v549, %v547
    %v590 = vpack.c.b16 %v552, %v550
    %v591 = vpack.c.b16 %v553, %v551
    %v592 = vpack.c.b16 %v556, %v554
    %v593 = vpack.c.b16 %v557, %v555
    %v594 = vpack.c.b16 %v560, %v558
    %v595 = vpack.c.b16 %v561, %v559
    %v596 = vpack.c.b16 %v564, %v562
    %v597 = vpack.c.b16 %v565, %v563
    %630 = vmatprep.subr.bf16.mxu0 %v581
    %631 = vmatpush1.bf16.msra.mxu0 %v580
    %632 = vmatprep.subr.bf16.mxu0 %v579
    %633 = vmatpush1.bf16.msra.mxu0 %v578
    %634 = vmatprep.subr.bf16.mxu0 %v577
    %635 = vmatpush1.bf16.msra.mxu0 %v576
    %636 = vmatprep.subr.bf16.mxu0 %v575
    %637 = vmatpush1.bf16.msra.mxu0 %v574
    %638 = vmatprep.subr.bf16.mxu0 %v573
    %639 = vmatpush1.bf16.msra.mxu0 %v572
    %640 = vmatprep.subr.bf16.mxu0 %v571
    %641 = vmatpush1.bf16.msra.mxu0 %v570
    %642 = vmatprep.subr.bf16.mxu0 %v569
    %643 = vmatpush1.bf16.msra.mxu0 %v568
    %644 = vmatprep.subr.bf16.mxu0 %v567
    %645 = vmatpush1.bf16.msra.mxu0 %v566
    %646 = vmatprep.subr.bf16.mxu0 %v597
    %647 = vmatpush2.bf16.msra.mxu0 %v596
    %648 = vmatprep.subr.bf16.mxu0 %v595
    %649 = vmatpush2.bf16.msra.mxu0 %v594
    %650 = vmatprep.subr.bf16.mxu0 %v593
    %651 = vmatpush2.bf16.msra.mxu0 %v592
    %652 = vmatprep.subr.bf16.mxu0 %v591
    %653 = vmatpush2.bf16.msra.mxu0 %v590
    %654 = vmatprep.subr.bf16.mxu0 %v589
    %655 = vmatpush2.bf16.msra.mxu0 %v588
    %656 = vmatprep.subr.bf16.mxu0 %v587
    %657 = vmatpush2.bf16.msra.mxu0 %v586
    %658 = vmatprep.subr.bf16.mxu0 %v585
    %659 = vmatpush2.bf16.msra.mxu0 %v584
    %660 = vmatprep.subr.bf16.mxu0 %v583
    %661 = vmatpush2.bf16.msra.mxu0 %v582
    %662 = vmatprep.mubr.bf16.mxu0 %v185
    %663 = vmatmul.mubr.bf16.gmra.mxu0 %v184
    %v664 = vpop.f32.mrf.mxu0
    %v665 = vadd.f32 %v452, %v664
    %v666 = vpop.f32.mrf.mxu0
    %v667 = vadd.f32 %v454, %v666
    %v668 = vpop.f32.mrf.mxu0
    %v669 = vadd.f32 %v456, %v668
    %v670 = vpop.f32.mrf.mxu0
    %v671 = vadd.f32 %v458, %v670
    %672 = vmatprep.mubr.bf16.mxu0 %v187
    %673 = vmatmul.mubr.bf16.gmra.mxu0 %v186
    %v674 = vpop.f32.mrf.mxu0
    %v675 = vadd.f32 %v462, %v674
    %v676 = vpop.f32.mrf.mxu0
    %v677 = vadd.f32 %v464, %v676
    %v678 = vpop.f32.mrf.mxu0
    %v679 = vadd.f32 %v466, %v678
    %v680 = vpop.f32.mrf.mxu0
    %v681 = vadd.f32 %v468, %v680
    %682 = vdwg.mxu0
    %v683 = vpack.c.bf16 %v178, %v176
    %v684 = vpack.c.bf16 %v179, %v177
    %v685 = vpack.c.bf16 %v182, %v180
    %v686 = vpack.c.bf16 %v183, %v181
    %s687 = scalar_lea.vmem [#allocation5], 512
    %v688 = vld [vmem:[%s687] sm:$0xff]
    %v689 = vld [vmem:[%s687 + $0x8] sm:$0xff]
    %v690 = vld [vmem:[%s687 + $0x10] sm:$0xff]
    %v691 = vld [vmem:[%s687 + $0x18] sm:$0xff]
    %v692 = vld [vmem:[%s687 + $0x20] sm:$0xff]
    %v693 = vld [vmem:[%s687 + $0x28] sm:$0xff]
    %v694 = vld [vmem:[%s687 + $0x30] sm:$0xff]
    %v695 = vld [vmem:[%s687 + $0x38] sm:$0xff]
    %v696 = vld [vmem:[%s687 + $0x40] sm:$0xff]
    %v697 = vld [vmem:[%s687 + $0x48] sm:$0xff]
    %v698 = vld [vmem:[%s687 + $0x50] sm:$0xff]
    %v699 = vld [vmem:[%s687 + $0x58] sm:$0xff]
    %v700 = vld [vmem:[%s687 + $0x60] sm:$0xff]
    %v701 = vld [vmem:[%s687 + $0x68] sm:$0xff]
    %v702 = vld [vmem:[%s687 + $0x70] sm:$0xff]
    %v703 = vld [vmem:[%s687 + $0x78] sm:$0xff]
    %v704 = vld [vmem:[%s687 + $0x80] sm:$0xff]
    %v705 = vld [vmem:[%s687 + $0x88] sm:$0xff]
    %v706 = vld [vmem:[%s687 + $0x90] sm:$0xff]
    %v707 = vld [vmem:[%s687 + $0x98] sm:$0xff]
    %v708 = vld [vmem:[%s687 + $0xa0] sm:$0xff]
    %v709 = vld [vmem:[%s687 + $0xa8] sm:$0xff]
    %v710 = vld [vmem:[%s687 + $0xb0] sm:$0xff]
    %v711 = vld [vmem:[%s687 + $0xb8] sm:$0xff]
    %v712 = vld [vmem:[%s687 + $0xc0] sm:$0xff]
    %v713 = vld [vmem:[%s687 + $0xc8] sm:$0xff]
    %v714 = vld [vmem:[%s687 + $0xd0] sm:$0xff]
    %v715 = vld [vmem:[%s687 + $0xd8] sm:$0xff]
    %v716 = vld [vmem:[%s687 + $0xe0] sm:$0xff]
    %v717 = vld [vmem:[%s687 + $0xe8] sm:$0xff]
    %v718 = vld [vmem:[%s687 + $0xf0] sm:$0xff]
    %v719 = vld [vmem:[%s687 + $0xf8] sm:$0xff]
    %v752 = vunpack.c.l.b16 %v688
    %v753 = vunpack.c.h.b16 %v688
    %v754 = vunpack.c.l.b16 %v689
    %v755 = vunpack.c.h.b16 %v689
    %v756 = vunpack.c.l.b16 %v690
    %v757 = vunpack.c.h.b16 %v690
    %v758 = vunpack.c.l.b16 %v691
    %v759 = vunpack.c.h.b16 %v691
    %v760 = vunpack.c.l.b16 %v692
    %v761 = vunpack.c.h.b16 %v692
    %v762 = vunpack.c.l.b16 %v693
    %v763 = vunpack.c.h.b16 %v693
    %v764 = vunpack.c.l.b16 %v694
    %v765 = vunpack.c.h.b16 %v694
    %v766 = vunpack.c.l.b16 %v695
    %v767 = vunpack.c.h.b16 %v695
    %v768 = vunpack.c.l.b16 %v696
    %v769 = vunpack.c.h.b16 %v696
    %v770 = vunpack.c.l.b16 %v697
    %v771 = vunpack.c.h.b16 %v697
    %v772 = vunpack.c.l.b16 %v698
    %v773 = vunpack.c.h.b16 %v698
    %v774 = vunpack.c.l.b16 %v699
    %v775 = vunpack.c.h.b16 %v699
    %v776 = vunpack.c.l.b16 %v700
    %v777 = vunpack.c.h.b16 %v700
    %v778 = vunpack.c.l.b16 %v701
    %v779 = vunpack.c.h.b16 %v701
    %v780 = vunpack.c.l.b16 %v702
    %v781 = vunpack.c.h.b16 %v702
    %v782 = vunpack.c.l.b16 %v703
    %v783 = vunpack.c.h.b16 %v703
    %v784 = vunpack.c.l.b16 %v704
    %v785 = vunpack.c.h.b16 %v704
    %v786 = vunpack.c.l.b16 %v705
    %v787 = vunpack.c.h.b16 %v705
    %v788 = vunpack.c.l.b16 %v706
    %v789 = vunpack.c.h.b16 %v706
    %v790 = vunpack.c.l.b16 %v707
    %v791 = vunpack.c.h.b16 %v707
    %v792 = vunpack.c.l.b16 %v708
    %v793 = vunpack.c.h.b16 %v708
    %v794 = vunpack.c.l.b16 %v709
    %v795 = vunpack.c.h.b16 %v709
    %v796 = vunpack.c.l.b16 %v710
    %v797 = vunpack.c.h.b16 %v710
    %v798 = vunpack.c.l.b16 %v711
    %v799 = vunpack.c.h.b16 %v711
    %v800 = vunpack.c.l.b16 %v712
    %v801 = vunpack.c.h.b16 %v712
    %v802 = vunpack.c.l.b16 %v713
    %v803 = vunpack.c.h.b16 %v713
    %v804 = vunpack.c.l.b16 %v714
    %v805 = vunpack.c.h.b16 %v714
    %v806 = vunpack.c.l.b16 %v715
    %v807 = vunpack.c.h.b16 %v715
    %v808 = vunpack.c.l.b16 %v716
    %v809 = vunpack.c.h.b16 %v716
    %v810 = vunpack.c.l.b16 %v717
    %v811 = vunpack.c.h.b16 %v717
    %v812 = vunpack.c.l.b16 %v718
    %v813 = vunpack.c.h.b16 %v718
    %v814 = vunpack.c.l.b16 %v719
    %v815 = vunpack.c.h.b16 %v719
    %v816 = vpack.c.b16 %v754, %v752
    %v817 = vpack.c.b16 %v755, %v753
    %v818 = vpack.c.b16 %v758, %v756
    %v819 = vpack.c.b16 %v759, %v757
    %v820 = vpack.c.b16 %v762, %v760
    %v821 = vpack.c.b16 %v763, %v761
    %v822 = vpack.c.b16 %v766, %v764
    %v823 = vpack.c.b16 %v767, %v765
    %v824 = vpack.c.b16 %v770, %v768
    %v825 = vpack.c.b16 %v771, %v769
    %v826 = vpack.c.b16 %v774, %v772
    %v827 = vpack.c.b16 %v775, %v773
    %v828 = vpack.c.b16 %v778, %v776
    %v829 = vpack.c.b16 %v779, %v777
    %v830 = vpack.c.b16 %v782, %v780
    %v831 = vpack.c.b16 %v783, %v781
    %v832 = vpack.c.b16 %v786, %v784
    %v833 = vpack.c.b16 %v787, %v785
    %v834 = vpack.c.b16 %v790, %v788
    %v835 = vpack.c.b16 %v791, %v789
    %v836 = vpack.c.b16 %v794, %v792
    %v837 = vpack.c.b16 %v795, %v793
    %v838 = vpack.c.b16 %v798, %v796
    %v839 = vpack.c.b16 %v799, %v797
    %v840 = vpack.c.b16 %v802, %v800
    %v841 = vpack.c.b16 %v803, %v801
    %v842 = vpack.c.b16 %v806, %v804
    %v843 = vpack.c.b16 %v807, %v805
    %v844 = vpack.c.b16 %v810, %v808
    %v845 = vpack.c.b16 %v811, %v809
    %v846 = vpack.c.b16 %v814, %v812
    %v847 = vpack.c.b16 %v815, %v813
    %880 = vmatprep.subr.bf16.mxu0 %v831
    %881 = vmatpush1.bf16.msra.mxu0 %v830
    %882 = vmatprep.subr.bf16.mxu0 %v829
    %883 = vmatpush1.bf16.msra.mxu0 %v828
    %884 = vmatprep.subr.bf16.mxu0 %v827
    %885 = vmatpush1.bf16.msra.mxu0 %v826
    %886 = vmatprep.subr.bf16.mxu0 %v825
    %887 = vmatpush1.bf16.msra.mxu0 %v824
    %888 = vmatprep.subr.bf16.mxu0 %v823
    %889 = vmatpush1.bf16.msra.mxu0 %v822
    %890 = vmatprep.subr.bf16.mxu0 %v821
    %891 = vmatpush1.bf16.msra.mxu0 %v820
    %892 = vmatprep.subr.bf16.mxu0 %v819
    %893 = vmatpush1.bf16.msra.mxu0 %v818
    %894 = vmatprep.subr.bf16.mxu0 %v817
    %895 = vmatpush1.bf16.msra.mxu0 %v816
    %896 = vmatprep.subr.bf16.mxu0 %v847
    %897 = vmatpush2.bf16.msra.mxu0 %v846
    %898 = vmatprep.subr.bf16.mxu0 %v845
    %899 = vmatpush2.bf16.msra.mxu0 %v844
    %900 = vmatprep.subr.bf16.mxu0 %v843
    %901 = vmatpush2.bf16.msra.mxu0 %v842
    %902 = vmatprep.subr.bf16.mxu0 %v841
    %903 = vmatpush2.bf16.msra.mxu0 %v840
    %904 = vmatprep.subr.bf16.mxu0 %v839
    %905 = vmatpush2.bf16.msra.mxu0 %v838
    %906 = vmatprep.subr.bf16.mxu0 %v837
    %907 = vmatpush2.bf16.msra.mxu0 %v836
    %908 = vmatprep.subr.bf16.mxu0 %v835
    %909 = vmatpush2.bf16.msra.mxu0 %v834
    %910 = vmatprep.subr.bf16.mxu0 %v833
    %911 = vmatpush2.bf16.msra.mxu0 %v832
    %912 = vmatprep.mubr.bf16.mxu0 %v684
    %913 = vmatmul.mubr.bf16.gmra.mxu0 %v683
    %v914 = vpop.f32.mrf.mxu0
    %v915 = vadd.f32 0.0, %v914
    %v916 = vpop.f32.mrf.mxu0
    %v917 = vadd.f32 0.0, %v916
    %v918 = vpop.f32.mrf.mxu0
    %v919 = vadd.f32 0.0, %v918
    %v920 = vpop.f32.mrf.mxu0
    %v921 = vadd.f32 0.0, %v920
    %922 = vmatprep.mubr.bf16.mxu0 %v686
    %923 = vmatmul.mubr.bf16.gmra.mxu0 %v685
    %v924 = vpop.f32.mrf.mxu0
    %v925 = vadd.f32 0.0, %v924
    %v926 = vpop.f32.mrf.mxu0
    %v927 = vadd.f32 0.0, %v926
    %v928 = vpop.f32.mrf.mxu0
    %v929 = vadd.f32 0.0, %v928
    %v930 = vpop.f32.mrf.mxu0
    %v931 = vadd.f32 0.0, %v930
    %932 = vdwg.mxu0
    %v933 = vadd.f32 %v665, %v915
    %v934 = vadd.f32 %v667, %v917
    %v935 = vadd.f32 %v669, %v919
    %v936 = vadd.f32 %v671, %v921
    %v937 = vadd.f32 %v675, %v925
    %v938 = vadd.f32 %v677, %v927
    %v939 = vadd.f32 %v679, %v929
    %v940 = vadd.f32 %v681, %v931
    %v941 = vlaneseq
    %v942 = vshrl.u32 %v941, 7
    %v943 = vsub.s32 0, %v942
    %v944 = vrot.slane %v54, %v943
    %v945 = vlaneseq
    %v946 = vshrl.u32 %v945, 7
    %v947 = vsub.s32 0, %v946
    %v948 = vrot.slane %v55, %v947
    %v949 = vmul.f32 %v933, %v944
    %v950 = vmul.f32 %v934, %v948
    %v951 = vmul.f32 %v935, %v944
    %v952 = vmul.f32 %v936, %v948
    %v953 = vmul.f32 %v937, %v944
    %v954 = vmul.f32 %v938, %v948
    %v955 = vmul.f32 %v939, %v944
    %v956 = vmul.f32 %v940, %v948
    %v957 = vlaneseq
    %v958 = vshrl.u32 %v957, 7
    %v959 = vsub.s32 1, %v958
    %v960 = vrot.slane %v54, %v959
    %v961 = vlaneseq
    %v962 = vshrl.u32 %v961, 7
    %v963 = vsub.s32 1, %v962
    %v964 = vrot.slane %v55, %v963
    %v965 = vadd.f32 %v949, %v960
    %v966 = vadd.f32 %v950, %v964
    %v967 = vadd.f32 %v951, %v960
    %v968 = vadd.f32 %v952, %v964
    %v969 = vadd.f32 %v953, %v960
    %v970 = vadd.f32 %v954, %v964
    %v971 = vadd.f32 %v955, %v960
    %v972 = vadd.f32 %v956, %v964
    %v973 = vlaneseq
    %v974 = vshrl.u32 %v973, 7
    %v975 = vsub.s32 1, %v974
    %v976 = vrot.slane %v56, %v975
    %v977 = vlaneseq
    %v978 = vshrl.u32 %v977, 7
    %v979 = vsub.s32 1, %v978
    %v980 = vrot.slane %v57, %v979
    %v981 = vmul.f32 %v965, %v976
    %v982 = vmul.f32 %v966, %v980
    %v983 = vmul.f32 %v967, %v976
    %v984 = vmul.f32 %v968, %v980
    %v985 = vmul.f32 %v969, %v976
    %v986 = vmul.f32 %v970, %v980
    %v987 = vmul.f32 %v971, %v976
    %v988 = vmul.f32 %v972, %v980
    %v989 = vlaneseq
    %v990 = vshrl.u32 %v989, 7
    %v991 = vsub.s32 0, %v990
    %v992 = vrot.slane %v56, %v991
    %v993 = vlaneseq
    %v994 = vshrl.u32 %v993, 7
    %v995 = vsub.s32 0, %v994
    %v996 = vrot.slane %v57, %v995
    %v997 = vadd.f32 %v992, %v981
    %v998 = vadd.f32 %v996, %v982
    %v999 = vadd.f32 %v992, %v983
    %v1000 = vadd.f32 %v996, %v984
    %v1001 = vadd.f32 %v992, %v985
    %v1002 = vadd.f32 %v996, %v986
    %v1003 = vadd.f32 %v992, %v987
    %v1004 = vadd.f32 %v996, %v988
    %v1005 = vmul.f32 %v965, %v997
    %v1006 = vmul.f32 %v966, %v998
    %v1007 = vmul.f32 %v967, %v999
    %v1008 = vmul.f32 %v968, %v1000
    %v1009 = vmul.f32 %v969, %v1001
    %v1010 = vmul.f32 %v970, %v1002
    %v1011 = vmul.f32 %v971, %v1003
    %v1012 = vmul.f32 %v972, %v1004
    %v1013 = vlaneseq
    %v1014 = vshrl.u32 %v1013, 7
    %v1015 = vsub.s32 7, %v1014
    %v1016 = vrot.slane %v54, %v1015
    %v1017 = vlaneseq
    %v1018 = vshrl.u32 %v1017, 7
    %v1019 = vsub.s32 7, %v1018
    %v1020 = vrot.slane %v55, %v1019
    %v1021 = vadd.f32 %v1016, %v1005
    %v1022 = vadd.f32 %v1020, %v1006
    %v1023 = vadd.f32 %v1016, %v1007
    %v1024 = vadd.f32 %v1020, %v1008
    %v1025 = vadd.f32 %v1016, %v1009
    %v1026 = vadd.f32 %v1020, %v1010
    %v1027 = vadd.f32 %v1016, %v1011
    %v1028 = vadd.f32 %v1020, %v1012
    %v1029 = vmul.f32 %v965, %v1021
    %v1030 = vmul.f32 %v966, %v1022
    %v1031 = vmul.f32 %v967, %v1023
    %v1032 = vmul.f32 %v968, %v1024
    %v1033 = vmul.f32 %v969, %v1025
    %v1034 = vmul.f32 %v970, %v1026
    %v1035 = vmul.f32 %v971, %v1027
    %v1036 = vmul.f32 %v972, %v1028
    %v1037 = vlaneseq
    %v1038 = vshrl.u32 %v1037, 7
    %v1039 = vsub.s32 6, %v1038
    %v1040 = vrot.slane %v54, %v1039
    %v1041 = vlaneseq
    %v1042 = vshrl.u32 %v1041, 7
    %v1043 = vsub.s32 6, %v1042
    %v1044 = vrot.slane %v55, %v1043
    %v1045 = vadd.f32 %v1040, %v1029
    %v1046 = vadd.f32 %v1044, %v1030
    %v1047 = vadd.f32 %v1040, %v1031
    %v1048 = vadd.f32 %v1044, %v1032
    %v1049 = vadd.f32 %v1040, %v1033
    %v1050 = vadd.f32 %v1044, %v1034
    %v1051 = vadd.f32 %v1040, %v1035
    %v1052 = vadd.f32 %v1044, %v1036
    %v1053 = vmul.f32 %v965, %v1045
    %v1054 = vmul.f32 %v966, %v1046
    %v1055 = vmul.f32 %v967, %v1047
    %v1056 = vmul.f32 %v968, %v1048
    %v1057 = vmul.f32 %v969, %v1049
    %v1058 = vmul.f32 %v970, %v1050
    %v1059 = vmul.f32 %v971, %v1051
    %v1060 = vmul.f32 %v972, %v1052
    %v1061 = vlaneseq
    %v1062 = vshrl.u32 %v1061, 7
    %v1063 = vsub.s32 5, %v1062
    %v1064 = vrot.slane %v54, %v1063
    %v1065 = vlaneseq
    %v1066 = vshrl.u32 %v1065, 7
    %v1067 = vsub.s32 5, %v1066
    %v1068 = vrot.slane %v55, %v1067
    %v1069 = vadd.f32 %v1064, %v1053
    %v1070 = vadd.f32 %v1068, %v1054
    %v1071 = vadd.f32 %v1064, %v1055
    %v1072 = vadd.f32 %v1068, %v1056
    %v1073 = vadd.f32 %v1064, %v1057
    %v1074 = vadd.f32 %v1068, %v1058
    %v1075 = vadd.f32 %v1064, %v1059
    %v1076 = vadd.f32 %v1068, %v1060
    %v1077 = vmul.f32 %v965, %v1069
    %v1078 = vmul.f32 %v966, %v1070
    %v1079 = vmul.f32 %v967, %v1071
    %v1080 = vmul.f32 %v968, %v1072
    %v1081 = vmul.f32 %v969, %v1073
    %v1082 = vmul.f32 %v970, %v1074
    %v1083 = vmul.f32 %v971, %v1075
    %v1084 = vmul.f32 %v972, %v1076
    %v1085 = vlaneseq
    %v1086 = vshrl.u32 %v1085, 7
    %v1087 = vsub.s32 4, %v1086
    %v1088 = vrot.slane %v54, %v1087
    %v1089 = vlaneseq
    %v1090 = vshrl.u32 %v1089, 7
    %v1091 = vsub.s32 4, %v1090
    %v1092 = vrot.slane %v55, %v1091
    %v1093 = vadd.f32 %v1088, %v1077
    %v1094 = vadd.f32 %v1092, %v1078
    %v1095 = vadd.f32 %v1088, %v1079
    %v1096 = vadd.f32 %v1092, %v1080
    %v1097 = vadd.f32 %v1088, %v1081
    %v1098 = vadd.f32 %v1092, %v1082
    %v1099 = vadd.f32 %v1088, %v1083
    %v1100 = vadd.f32 %v1092, %v1084
    %v1101 = vlaneseq
    %v1102 = vshrl.u32 %v1101, 7
    %v1103 = vsub.s32 5, %v1102
    %v1104 = vrot.slane %v56, %v1103
    %v1105 = vlaneseq
    %v1106 = vshrl.u32 %v1105, 7
    %v1107 = vsub.s32 5, %v1106
    %v1108 = vrot.slane %v57, %v1107
    %v1109 = vmul.f32 %v965, %v1104
    %v1110 = vmul.f32 %v966, %v1108
    %v1111 = vmul.f32 %v967, %v1104
    %v1112 = vmul.f32 %v968, %v1108
    %v1113 = vmul.f32 %v969, %v1104
    %v1114 = vmul.f32 %v970, %v1108
    %v1115 = vmul.f32 %v971, %v1104
    %v1116 = vmul.f32 %v972, %v1108
    %v1117 = vlaneseq
    %v1118 = vshrl.u32 %v1117, 7
    %v1119 = vsub.s32 4, %v1118
    %v1120 = vrot.slane %v56, %v1119
    %v1121 = vlaneseq
    %v1122 = vshrl.u32 %v1121, 7
    %v1123 = vsub.s32 4, %v1122
    %v1124 = vrot.slane %v57, %v1123
    %v1125 = vadd.f32 %v1120, %v1109
    %v1126 = vadd.f32 %v1124, %v1110
    %v1127 = vadd.f32 %v1120, %v1111
    %v1128 = vadd.f32 %v1124, %v1112
    %v1129 = vadd.f32 %v1120, %v1113
    %v1130 = vadd.f32 %v1124, %v1114
    %v1131 = vadd.f32 %v1120, %v1115
    %v1132 = vadd.f32 %v1124, %v1116
    %v1133 = vmul.f32 %v965, %v1125
    %v1134 = vmul.f32 %v966, %v1126
    %v1135 = vmul.f32 %v967, %v1127
    %v1136 = vmul.f32 %v968, %v1128
    %v1137 = vmul.f32 %v969, %v1129
    %v1138 = vmul.f32 %v970, %v1130
    %v1139 = vmul.f32 %v971, %v1131
    %v1140 = vmul.f32 %v972, %v1132
    %v1141 = vlaneseq
    %v1142 = vshrl.u32 %v1141, 7
    %v1143 = vsub.s32 3, %v1142
    %v1144 = vrot.slane %v56, %v1143
    %v1145 = vlaneseq
    %v1146 = vshrl.u32 %v1145, 7
    %v1147 = vsub.s32 3, %v1146
    %v1148 = vrot.slane %v57, %v1147
    %v1149 = vadd.f32 %v1144, %v1133
    %v1150 = vadd.f32 %v1148, %v1134
    %v1151 = vadd.f32 %v1144, %v1135
    %v1152 = vadd.f32 %v1148, %v1136
    %v1153 = vadd.f32 %v1144, %v1137
    %v1154 = vadd.f32 %v1148, %v1138
    %v1155 = vadd.f32 %v1144, %v1139
    %v1156 = vadd.f32 %v1148, %v1140
    %v1157 = vmul.f32 %v965, %v1149
    %v1158 = vmul.f32 %v966, %v1150
    %v1159 = vmul.f32 %v967, %v1151
    %v1160 = vmul.f32 %v968, %v1152
    %v1161 = vmul.f32 %v969, %v1153
    %v1162 = vmul.f32 %v970, %v1154
    %v1163 = vmul.f32 %v971, %v1155
    %v1164 = vmul.f32 %v972, %v1156
    %v1165 = vlaneseq
    %v1166 = vshrl.u32 %v1165, 7
    %v1167 = vsub.s32 2, %v1166
    %v1168 = vrot.slane %v56, %v1167
    %v1169 = vlaneseq
    %v1170 = vshrl.u32 %v1169, 7
    %v1171 = vsub.s32 2, %v1170
    %v1172 = vrot.slane %v57, %v1171
    %v1173 = vadd.f32 %v1168, %v1157
    %v1174 = vadd.f32 %v1172, %v1158
    %v1175 = vadd.f32 %v1168, %v1159
    %v1176 = vadd.f32 %v1172, %v1160
    %v1177 = vadd.f32 %v1168, %v1161
    %v1178 = vadd.f32 %v1172, %v1162
    %v1179 = vadd.f32 %v1168, %v1163
    %v1180 = vadd.f32 %v1172, %v1164
    %v1181 = vmul.f32 %v965, %v1173
    %v1182 = vmul.f32 %v966, %v1174
    %v1183 = vmul.f32 %v967, %v1175
    %v1184 = vmul.f32 %v968, %v1176
    %v1185 = vmul.f32 %v969, %v1177
    %v1186 = vmul.f32 %v970, %v1178
    %v1187 = vmul.f32 %v971, %v1179
    %v1188 = vmul.f32 %v972, %v1180
    %v1189 = vand.u32 2147483647, %v1181
    %v1190 = vand.u32 2147483647, %v1182
    %v1191 = vand.u32 2147483647, %v1183
    %v1192 = vand.u32 2147483647, %v1184
    %v1193 = vand.u32 2147483647, %v1185
    %v1194 = vand.u32 2147483647, %v1186
    %v1195 = vand.u32 2147483647, %v1187
    %v1196 = vand.u32 2147483647, %v1188
    %v1197 = vadd.f32 %v1189, 1.0
    %v1198 = vadd.f32 %v1190, 1.0
    %v1199 = vadd.f32 %v1191, 1.0
    %v1200 = vadd.f32 %v1192, 1.0
    %v1201 = vadd.f32 %v1193, 1.0
    %v1202 = vadd.f32 %v1194, 1.0
    %v1203 = vadd.f32 %v1195, 1.0
    %v1204 = vadd.f32 %v1196, 1.0
    %v1205 = vrcp.pop %v1197
    %v1206 = vrcp.pop %v1198
    %v1207 = vrcp.pop %v1199
    %v1208 = vrcp.pop %v1200
    %v1209 = vrcp.pop %v1201
    %v1210 = vrcp.pop %v1202
    %v1211 = vrcp.pop %v1203
    %v1212 = vrcp.pop %v1204
    %v1213 = vmul.f32 %v1093, %v1205
    %v1214 = vmul.f32 %v1094, %v1206
    %v1215 = vmul.f32 %v1095, %v1207
    %v1216 = vmul.f32 %v1096, %v1208
    %v1217 = vmul.f32 %v1097, %v1209
    %v1218 = vmul.f32 %v1098, %v1210
    %v1219 = vmul.f32 %v1099, %v1211
    %v1220 = vmul.f32 %v1100, %v1212
    %v1229 = vrot.slane %v1213, 7
    %v1230 = vrot.slane %v1214, 7
    %v1231 = vrot.slane %v1215, 7
    %v1232 = vsel %vm78, %v1229, %v1231
    %v1233 = vrot.slane %v1216, 7
    %v1234 = vsel %vm78, %v1230, %v1233
    %v1235 = vrot.slane %v1217, 7
    %v1236 = vsel %vm78, %v1231, %v1235
    %v1237 = vrot.slane %v1218, 7
    %v1238 = vsel %vm78, %v1233, %v1237
    %v1239 = vrot.slane %v1219, 7
    %v1240 = vsel %vm78, %v1235, %v1239
    %v1241 = vrot.slane %v1220, 7
    %v1242 = vsel %vm78, %v1237, %v1241
    %v1251 = vsel %vm78, 0.0, %v1229
    %v1252 = vsel %vm78, 0.0, %v1230
    %v1253 = vsel %vm119, %v1251, 0.0
    %v1254 = vsel %vm119, %v1252, 0.0
    %v1255 = vsel %vm120, %v1232, 0.0
    %v1256 = vsel %vm120, %v1234, 0.0
    %v1257 = vsel %vm121, %v1236, 0.0
    %v1258 = vsel %vm121, %v1238, 0.0
    %v1259 = vsel %vm122, %v1240, 0.0
    %v1260 = vsel %vm122, %v1242, 0.0
    %v1261 = vrot.slane %v1213, 1
    %v1262 = vrot.slane %v1215, 1
    %v1263 = vsel %vm131, %v1261, %v1262
    %v1264 = vrot.slane %v1214, 1
    %v1265 = vrot.slane %v1216, 1
    %v1266 = vsel %vm131, %v1264, %v1265
    %v1267 = vrot.slane %v1217, 1
    %v1268 = vsel %vm131, %v1262, %v1267
    %v1269 = vrot.slane %v1218, 1
    %v1270 = vsel %vm131, %v1265, %v1269
    %v1271 = vrot.slane %v1219, 1
    %v1272 = vsel %vm131, %v1267, %v1271
    %v1273 = vrot.slane %v1220, 1
    %v1274 = vsel %vm131, %v1269, %v1273
    %v1283 = vsel %vm131, %v1271, 0.0
    %v1284 = vsel %vm131, %v1273, 0.0
    %v1285 = vsel %vm172, %v1263, 0.0
    %v1286 = vsel %vm172, %v1266, 0.0
    %v1287 = vsel %vm173, %v1268, 0.0
    %v1288 = vsel %vm173, %v1270, 0.0
    %v1289 = vsel %vm174, %v1272, 0.0
    %v1290 = vsel %vm174, %v1274, 0.0
    %v1291 = vsel %vm175, %v1283, 0.0
    %v1292 = vsel %vm175, %v1284, 0.0
    %v1293 = vpack.c.bf16 %v1255, %v1253
    %v1294 = vpack.c.bf16 %v1256, %v1254
    %v1295 = vpack.c.bf16 %v1259, %v1257
    %v1296 = vpack.c.bf16 %v1260, %v1258
    %s1297 = scalar_lea.vmem [#allocation5], 768
    %v1298 = vld [vmem:[%s1297] sm:$0xff]
    %v1299 = vld [vmem:[%s1297 + $0x8] sm:$0xff]
    %v1300 = vld [vmem:[%s1297 + $0x10] sm:$0xff]
    %v1301 = vld [vmem:[%s1297 + $0x18] sm:$0xff]
    %v1302 = vld [vmem:[%s1297 + $0x20] sm:$0xff]
    %v1303 = vld [vmem:[%s1297 + $0x28] sm:$0xff]
    %v1304 = vld [vmem:[%s1297 + $0x30] sm:$0xff]
    %v1305 = vld [vmem:[%s1297 + $0x38] sm:$0xff]
    %v1306 = vld [vmem:[%s1297 + $0x40] sm:$0xff]
    %v1307 = vld [vmem:[%s1297 + $0x48] sm:$0xff]
    %v1308 = vld [vmem:[%s1297 + $0x50] sm:$0xff]
    %v1309 = vld [vmem:[%s1297 + $0x58] sm:$0xff]
    %v1310 = vld [vmem:[%s1297 + $0x60] sm:$0xff]
    %v1311 = vld [vmem:[%s1297 + $0x68] sm:$0xff]
    %v1312 = vld [vmem:[%s1297 + $0x70] sm:$0xff]
    %v1313 = vld [vmem:[%s1297 + $0x78] sm:$0xff]
    %v1314 = vld [vmem:[%s1297 + $0x80] sm:$0xff]
    %v1315 = vld [vmem:[%s1297 + $0x88] sm:$0xff]
    %v1316 = vld [vmem:[%s1297 + $0x90] sm:$0xff]
    %v1317 = vld [vmem:[%s1297 + $0x98] sm:$0xff]
    %v1318 = vld [vmem:[%s1297 + $0xa0] sm:$0xff]
    %v1319 = vld [vmem:[%s1297 + $0xa8] sm:$0xff]
    %v1320 = vld [vmem:[%s1297 + $0xb0] sm:$0xff]
    %v1321 = vld [vmem:[%s1297 + $0xb8] sm:$0xff]
    %v1322 = vld [vmem:[%s1297 + $0xc0] sm:$0xff]
    %v1323 = vld [vmem:[%s1297 + $0xc8] sm:$0xff]
    %v1324 = vld [vmem:[%s1297 + $0xd0] sm:$0xff]
    %v1325 = vld [vmem:[%s1297 + $0xd8] sm:$0xff]
    %v1326 = vld [vmem:[%s1297 + $0xe0] sm:$0xff]
    %v1327 = vld [vmem:[%s1297 + $0xe8] sm:$0xff]
    %v1328 = vld [vmem:[%s1297 + $0xf0] sm:$0xff]
    %v1329 = vld [vmem:[%s1297 + $0xf8] sm:$0xff]
    %v1330 = vpack.c.bf16 %v1215, %v1213
    %v1331 = vpack.c.bf16 %v1216, %v1214
    %v1332 = vpack.c.bf16 %v1219, %v1217
    %v1333 = vpack.c.bf16 %v1220, %v1218
    %s1334 = scalar_lea.vmem [#allocation5], 1024
    %v1335 = vld [vmem:[%s1334] sm:$0xff]
    %v1336 = vld [vmem:[%s1334 + $0x8] sm:$0xff]
    %v1337 = vld [vmem:[%s1334 + $0x10] sm:$0xff]
    %v1338 = vld [vmem:[%s1334 + $0x18] sm:$0xff]
    %v1339 = vld [vmem:[%s1334 + $0x20] sm:$0xff]
    %v1340 = vld [vmem:[%s1334 + $0x28] sm:$0xff]
    %v1341 = vld [vmem:[%s1334 + $0x30] sm:$0xff]
    %v1342 = vld [vmem:[%s1334 + $0x38] sm:$0xff]
    %v1343 = vld [vmem:[%s1334 + $0x40] sm:$0xff]
    %v1344 = vld [vmem:[%s1334 + $0x48] sm:$0xff]
    %v1345 = vld [vmem:[%s1334 + $0x50] sm:$0xff]
    %v1346 = vld [vmem:[%s1334 + $0x58] sm:$0xff]
    %v1347 = vld [vmem:[%s1334 + $0x60] sm:$0xff]
    %v1348 = vld [vmem:[%s1334 + $0x68] sm:$0xff]
    %v1349 = vld [vmem:[%s1334 + $0x70] sm:$0xff]
    %v1350 = vld [vmem:[%s1334 + $0x78] sm:$0xff]
    %v1351 = vld [vmem:[%s1334 + $0x80] sm:$0xff]
    %v1352 = vld [vmem:[%s1334 + $0x88] sm:$0xff]
    %v1353 = vld [vmem:[%s1334 + $0x90] sm:$0xff]
    %v1354 = vld [vmem:[%s1334 + $0x98] sm:$0xff]
    %v1355 = vld [vmem:[%s1334 + $0xa0] sm:$0xff]
    %v1356 = vld [vmem:[%s1334 + $0xa8] sm:$0xff]
    %v1357 = vld [vmem:[%s1334 + $0xb0] sm:$0xff]
    %v1358 = vld [vmem:[%s1334 + $0xb8] sm:$0xff]
    %v1359 = vld [vmem:[%s1334 + $0xc0] sm:$0xff]
    %v1360 = vld [vmem:[%s1334 + $0xc8] sm:$0xff]
    %v1361 = vld [vmem:[%s1334 + $0xd0] sm:$0xff]
    %v1362 = vld [vmem:[%s1334 + $0xd8] sm:$0xff]
    %v1363 = vld [vmem:[%s1334 + $0xe0] sm:$0xff]
    %v1364 = vld [vmem:[%s1334 + $0xe8] sm:$0xff]
    %v1365 = vld [vmem:[%s1334 + $0xf0] sm:$0xff]
    %v1366 = vld [vmem:[%s1334 + $0xf8] sm:$0xff]
    %v1399 = vunpack.c.l.b16 %v1335
    %v1400 = vunpack.c.h.b16 %v1335
    %v1401 = vunpack.c.l.b16 %v1336
    %v1402 = vunpack.c.h.b16 %v1336
    %v1403 = vunpack.c.l.b16 %v1337
    %v1404 = vunpack.c.h.b16 %v1337
    %v1405 = vunpack.c.l.b16 %v1338
    %v1406 = vunpack.c.h.b16 %v1338
    %v1407 = vunpack.c.l.b16 %v1339
    %v1408 = vunpack.c.h.b16 %v1339
    %v1409 = vunpack.c.l.b16 %v1340
    %v1410 = vunpack.c.h.b16 %v1340
    %v1411 = vunpack.c.l.b16 %v1341
    %v1412 = vunpack.c.h.b16 %v1341
    %v1413 = vunpack.c.l.b16 %v1342
    %v1414 = vunpack.c.h.b16 %v1342
    %v1415 = vunpack.c.l.b16 %v1343
    %v1416 = vunpack.c.h.b16 %v1343
    %v1417 = vunpack.c.l.b16 %v1344
    %v1418 = vunpack.c.h.b16 %v1344
    %v1419 = vunpack.c.l.b16 %v1345
    %v1420 = vunpack.c.h.b16 %v1345
    %v1421 = vunpack.c.l.b16 %v1346
    %v1422 = vunpack.c.h.b16 %v1346
    %v1423 = vunpack.c.l.b16 %v1347
    %v1424 = vunpack.c.h.b16 %v1347
    %v1425 = vunpack.c.l.b16 %v1348
    %v1426 = vunpack.c.h.b16 %v1348
    %v1427 = vunpack.c.l.b16 %v1349
    %v1428 = vunpack.c.h.b16 %v1349
    %v1429 = vunpack.c.l.b16 %v1350
    %v1430 = vunpack.c.h.b16 %v1350
    %v1431 = vunpack.c.l.b16 %v1351
    %v1432 = vunpack.c.h.b16 %v1351
    %v1433 = vunpack.c.l.b16 %v1352
    %v1434 = vunpack.c.h.b16 %v1352
    %v1435 = vunpack.c.l.b16 %v1353
    %v1436 = vunpack.c.h.b16 %v1353
    %v1437 = vunpack.c.l.b16 %v1354
    %v1438 = vunpack.c.h.b16 %v1354
    %v1439 = vunpack.c.l.b16 %v1355
    %v1440 = vunpack.c.h.b16 %v1355
    %v1441 = vunpack.c.l.b16 %v1356
    %v1442 = vunpack.c.h.b16 %v1356
    %v1443 = vunpack.c.l.b16 %v1357
    %v1444 = vunpack.c.h.b16 %v1357
    %v1445 = vunpack.c.l.b16 %v1358
    %v1446 = vunpack.c.h.b16 %v1358
    %v1447 = vunpack.c.l.b16 %v1359
    %v1448 = vunpack.c.h.b16 %v1359
    %v1449 = vunpack.c.l.b16 %v1360
    %v1450 = vunpack.c.h.b16 %v1360
    %v1451 = vunpack.c.l.b16 %v1361
    %v1452 = vunpack.c.h.b16 %v1361
    %v1453 = vunpack.c.l.b16 %v1362
    %v1454 = vunpack.c.h.b16 %v1362
    %v1455 = vunpack.c.l.b16 %v1363
    %v1456 = vunpack.c.h.b16 %v1363
    %v1457 = vunpack.c.l.b16 %v1364
    %v1458 = vunpack.c.h.b16 %v1364
    %v1459 = vunpack.c.l.b16 %v1365
    %v1460 = vunpack.c.h.b16 %v1365
    %v1461 = vunpack.c.l.b16 %v1366
    %v1462 = vunpack.c.h.b16 %v1366
    %v1463 = vpack.c.b16 %v1401, %v1399
    %v1464 = vpack.c.b16 %v1402, %v1400
    %v1465 = vpack.c.b16 %v1405, %v1403
    %v1466 = vpack.c.b16 %v1406, %v1404
    %v1467 = vpack.c.b16 %v1409, %v1407
    %v1468 = vpack.c.b16 %v1410, %v1408
    %v1469 = vpack.c.b16 %v1413, %v1411
    %v1470 = vpack.c.b16 %v1414, %v1412
    %v1471 = vpack.c.b16 %v1417, %v1415
    %v1472 = vpack.c.b16 %v1418, %v1416
    %v1473 = vpack.c.b16 %v1421, %v1419
    %v1474 = vpack.c.b16 %v1422, %v1420
    %v1475 = vpack.c.b16 %v1425, %v1423
    %v1476 = vpack.c.b16 %v1426, %v1424
    %v1477 = vpack.c.b16 %v1429, %v1427
    %v1478 = vpack.c.b16 %v1430, %v1428
    %v1479 = vpack.c.b16 %v1433, %v1431
    %v1480 = vpack.c.b16 %v1434, %v1432
    %v1481 = vpack.c.b16 %v1437, %v1435
    %v1482 = vpack.c.b16 %v1438, %v1436
    %v1483 = vpack.c.b16 %v1441, %v1439
    %v1484 = vpack.c.b16 %v1442, %v1440
    %v1485 = vpack.c.b16 %v1445, %v1443
    %v1486 = vpack.c.b16 %v1446, %v1444
    %v1487 = vpack.c.b16 %v1449, %v1447
    %v1488 = vpack.c.b16 %v1450, %v1448
    %v1489 = vpack.c.b16 %v1453, %v1451
    %v1490 = vpack.c.b16 %v1454, %v1452
    %v1491 = vpack.c.b16 %v1457, %v1455
    %v1492 = vpack.c.b16 %v1458, %v1456
    %v1493 = vpack.c.b16 %v1461, %v1459
    %v1494 = vpack.c.b16 %v1462, %v1460
    %1527 = vmatprep.subr.bf16.mxu0 %v1478
    %1528 = vmatpush1.bf16.msra.mxu0 %v1477
    %1529 = vmatprep.subr.bf16.mxu0 %v1476
    %1530 = vmatpush1.bf16.msra.mxu0 %v1475
    %1531 = vmatprep.subr.bf16.mxu0 %v1474
    %1532 = vmatpush1.bf16.msra.mxu0 %v1473
    %1533 = vmatprep.subr.bf16.mxu0 %v1472
    %1534 = vmatpush1.bf16.msra.mxu0 %v1471
    %1535 = vmatprep.subr.bf16.mxu0 %v1470
    %1536 = vmatpush1.bf16.msra.mxu0 %v1469
    %1537 = vmatprep.subr.bf16.mxu0 %v1468
    %1538 = vmatpush1.bf16.msra.mxu0 %v1467
    %1539 = vmatprep.subr.bf16.mxu0 %v1466
    %1540 = vmatpush1.bf16.msra.mxu0 %v1465
    %1541 = vmatprep.subr.bf16.mxu0 %v1464
    %1542 = vmatpush1.bf16.msra.mxu0 %v1463
    %1543 = vmatprep.subr.bf16.mxu0 %v1494
    %1544 = vmatpush2.bf16.msra.mxu0 %v1493
    %1545 = vmatprep.subr.bf16.mxu0 %v1492
    %1546 = vmatpush2.bf16.msra.mxu0 %v1491
    %1547 = vmatprep.subr.bf16.mxu0 %v1490
    %1548 = vmatpush2.bf16.msra.mxu0 %v1489
    %1549 = vmatprep.subr.bf16.mxu0 %v1488
    %1550 = vmatpush2.bf16.msra.mxu0 %v1487
    %1551 = vmatprep.subr.bf16.mxu0 %v1486
    %1552 = vmatpush2.bf16.msra.mxu0 %v1485
    %1553 = vmatprep.subr.bf16.mxu0 %v1484
    %1554 = vmatpush2.bf16.msra.mxu0 %v1483
    %1555 = vmatprep.subr.bf16.mxu0 %v1482
    %1556 = vmatpush2.bf16.msra.mxu0 %v1481
    %1557 = vmatprep.subr.bf16.mxu0 %v1480
    %1558 = vmatpush2.bf16.msra.mxu0 %v1479
    %1559 = vmatprep.mubr.bf16.mxu0 %v1331
    %1560 = vmatmul.mubr.bf16.gmra.mxu0 %v1330
    %v1561 = vpop.f32.mrf.mxu0
    %v1562 = vadd.f32 0.0, %v1561
    %v1563 = vpop.f32.mrf.mxu0
    %v1564 = vadd.f32 0.0, %v1563
    %v1565 = vpop.f32.mrf.mxu0
    %v1566 = vadd.f32 0.0, %v1565
    %v1567 = vpop.f32.mrf.mxu0
    %v1568 = vadd.f32 0.0, %v1567
    %1569 = vmatprep.mubr.bf16.mxu0 %v1333
    %1570 = vmatmul.mubr.bf16.gmra.mxu0 %v1332
    %v1571 = vpop.f32.mrf.mxu0
    %v1572 = vadd.f32 0.0, %v1571
    %v1573 = vpop.f32.mrf.mxu0
    %v1574 = vadd.f32 0.0, %v1573
    %v1575 = vpop.f32.mrf.mxu0
    %v1576 = vadd.f32 0.0, %v1575
    %v1577 = vpop.f32.mrf.mxu0
    %v1578 = vadd.f32 0.0, %v1577
    %1579 = vdwg.mxu0
    %v1612 = vunpack.c.l.b16 %v1298
    %v1613 = vunpack.c.h.b16 %v1298
    %v1614 = vunpack.c.l.b16 %v1299
    %v1615 = vunpack.c.h.b16 %v1299
    %v1616 = vunpack.c.l.b16 %v1300
    %v1617 = vunpack.c.h.b16 %v1300
    %v1618 = vunpack.c.l.b16 %v1301
    %v1619 = vunpack.c.h.b16 %v1301
    %v1620 = vunpack.c.l.b16 %v1302
    %v1621 = vunpack.c.h.b16 %v1302
    %v1622 = vunpack.c.l.b16 %v1303
    %v1623 = vunpack.c.h.b16 %v1303
    %v1624 = vunpack.c.l.b16 %v1304
    %v1625 = vunpack.c.h.b16 %v1304
    %v1626 = vunpack.c.l.b16 %v1305
    %v1627 = vunpack.c.h.b16 %v1305
    %v1628 = vunpack.c.l.b16 %v1306
    %v1629 = vunpack.c.h.b16 %v1306
    %v1630 = vunpack.c.l.b16 %v1307
    %v1631 = vunpack.c.h.b16 %v1307
    %v1632 = vunpack.c.l.b16 %v1308
    %v1633 = vunpack.c.h.b16 %v1308
    %v1634 = vunpack.c.l.b16 %v1309
    %v1635 = vunpack.c.h.b16 %v1309
    %v1636 = vunpack.c.l.b16 %v1310
    %v1637 = vunpack.c.h.b16 %v1310
    %v1638 = vunpack.c.l.b16 %v1311
    %v1639 = vunpack.c.h.b16 %v1311
    %v1640 = vunpack.c.l.b16 %v1312
    %v1641 = vunpack.c.h.b16 %v1312
    %v1642 = vunpack.c.l.b16 %v1313
    %v1643 = vunpack.c.h.b16 %v1313
    %v1644 = vunpack.c.l.b16 %v1314
    %v1645 = vunpack.c.h.b16 %v1314
    %v1646 = vunpack.c.l.b16 %v1315
    %v1647 = vunpack.c.h.b16 %v1315
    %v1648 = vunpack.c.l.b16 %v1316
    %v1649 = vunpack.c.h.b16 %v1316
    %v1650 = vunpack.c.l.b16 %v1317
    %v1651 = vunpack.c.h.b16 %v1317
    %v1652 = vunpack.c.l.b16 %v1318
    %v1653 = vunpack.c.h.b16 %v1318
    %v1654 = vunpack.c.l.b16 %v1319
    %v1655 = vunpack.c.h.b16 %v1319
    %v1656 = vunpack.c.l.b16 %v1320
    %v1657 = vunpack.c.h.b16 %v1320
    %v1658 = vunpack.c.l.b16 %v1321
    %v1659 = vunpack.c.h.b16 %v1321
    %v1660 = vunpack.c.l.b16 %v1322
    %v1661 = vunpack.c.h.b16 %v1322
    %v1662 = vunpack.c.l.b16 %v1323
    %v1663 = vunpack.c.h.b16 %v1323
    %v1664 = vunpack.c.l.b16 %v1324
    %v1665 = vunpack.c.h.b16 %v1324
    %v1666 = vunpack.c.l.b16 %v1325
    %v1667 = vunpack.c.h.b16 %v1325
    %v1668 = vunpack.c.l.b16 %v1326
    %v1669 = vunpack.c.h.b16 %v1326
    %v1670 = vunpack.c.l.b16 %v1327
    %v1671 = vunpack.c.h.b16 %v1327
    %v1672 = vunpack.c.l.b16 %v1328
    %v1673 = vunpack.c.h.b16 %v1328
    %v1674 = vunpack.c.l.b16 %v1329
    %v1675 = vunpack.c.h.b16 %v1329
    %v1676 = vpack.c.b16 %v1614, %v1612
    %v1677 = vpack.c.b16 %v1615, %v1613
    %v1678 = vpack.c.b16 %v1618, %v1616
    %v1679 = vpack.c.b16 %v1619, %v1617
    %v1680 = vpack.c.b16 %v1622, %v1620
    %v1681 = vpack.c.b16 %v1623, %v1621
    %v1682 = vpack.c.b16 %v1626, %v1624
    %v1683 = vpack.c.b16 %v1627, %v1625
    %v1684 = vpack.c.b16 %v1630, %v1628
    %v1685 = vpack.c.b16 %v1631, %v1629
    %v1686 = vpack.c.b16 %v1634, %v1632
    %v1687 = vpack.c.b16 %v1635, %v1633
    %v1688 = vpack.c.b16 %v1638, %v1636
    %v1689 = vpack.c.b16 %v1639, %v1637
    %v1690 = vpack.c.b16 %v1642, %v1640
    %v1691 = vpack.c.b16 %v1643, %v1641
    %v1692 = vpack.c.b16 %v1646, %v1644
    %v1693 = vpack.c.b16 %v1647, %v1645
    %v1694 = vpack.c.b16 %v1650, %v1648
    %v1695 = vpack.c.b16 %v1651, %v1649
    %v1696 = vpack.c.b16 %v1654, %v1652
    %v1697 = vpack.c.b16 %v1655, %v1653
    %v1698 = vpack.c.b16 %v1658, %v1656
    %v1699 = vpack.c.b16 %v1659, %v1657
    %v1700 = vpack.c.b16 %v1662, %v1660
    %v1701 = vpack.c.b16 %v1663, %v1661
    %v1702 = vpack.c.b16 %v1666, %v1664
    %v1703 = vpack.c.b16 %v1667, %v1665
    %v1704 = vpack.c.b16 %v1670, %v1668
    %v1705 = vpack.c.b16 %v1671, %v1669
    %v1706 = vpack.c.b16 %v1674, %v1672
    %v1707 = vpack.c.b16 %v1675, %v1673
    %1740 = vmatprep.subr.bf16.mxu0 %v1691
    %1741 = vmatpush1.bf16.msra.mxu0 %v1690
    %1742 = vmatprep.subr.bf16.mxu0 %v1689
    %1743 = vmatpush1.bf16.msra.mxu0 %v1688
    %1744 = vmatprep.subr.bf16.mxu0 %v1687
    %1745 = vmatpush1.bf16.msra.mxu0 %v1686
    %1746 = vmatprep.subr.bf16.mxu0 %v1685
    %1747 = vmatpush1.bf16.msra.mxu0 %v1684
    %1748 = vmatprep.subr.bf16.mxu0 %v1683
    %1749 = vmatpush1.bf16.msra.mxu0 %v1682
    %1750 = vmatprep.subr.bf16.mxu0 %v1681
    %1751 = vmatpush1.bf16.msra.mxu0 %v1680
    %1752 = vmatprep.subr.bf16.mxu0 %v1679
    %1753 = vmatpush1.bf16.msra.mxu0 %v1678
    %1754 = vmatprep.subr.bf16.mxu0 %v1677
    %1755 = vmatpush1.bf16.msra.mxu0 %v1676
    %1756 = vmatprep.subr.bf16.mxu0 %v1707
    %1757 = vmatpush2.bf16.msra.mxu0 %v1706
    %1758 = vmatprep.subr.bf16.mxu0 %v1705
    %1759 = vmatpush2.bf16.msra.mxu0 %v1704
    %1760 = vmatprep.subr.bf16.mxu0 %v1703
    %1761 = vmatpush2.bf16.msra.mxu0 %v1702
    %1762 = vmatprep.subr.bf16.mxu0 %v1701
    %1763 = vmatpush2.bf16.msra.mxu0 %v1700
    %1764 = vmatprep.subr.bf16.mxu0 %v1699
    %1765 = vmatpush2.bf16.msra.mxu0 %v1698
    %1766 = vmatprep.subr.bf16.mxu0 %v1697
    %1767 = vmatpush2.bf16.msra.mxu0 %v1696
    %1768 = vmatprep.subr.bf16.mxu0 %v1695
    %1769 = vmatpush2.bf16.msra.mxu0 %v1694
    %1770 = vmatprep.subr.bf16.mxu0 %v1693
    %1771 = vmatpush2.bf16.msra.mxu0 %v1692
    %1772 = vmatprep.mubr.bf16.mxu0 %v1294
    %1773 = vmatmul.mubr.bf16.gmra.mxu0 %v1293
    %v1774 = vpop.f32.mrf.mxu0
    %v1775 = vadd.f32 %v1562, %v1774
    %v1776 = vpop.f32.mrf.mxu0
    %v1777 = vadd.f32 %v1564, %v1776
    %v1778 = vpop.f32.mrf.mxu0
    %v1779 = vadd.f32 %v1566, %v1778
    %v1780 = vpop.f32.mrf.mxu0
    %v1781 = vadd.f32 %v1568, %v1780
    %1782 = vmatprep.mubr.bf16.mxu0 %v1296
    %1783 = vmatmul.mubr.bf16.gmra.mxu0 %v1295
    %v1784 = vpop.f32.mrf.mxu0
    %v1785 = vadd.f32 %v1572, %v1784
    %v1786 = vpop.f32.mrf.mxu0
    %v1787 = vadd.f32 %v1574, %v1786
    %v1788 = vpop.f32.mrf.mxu0
    %v1789 = vadd.f32 %v1576, %v1788
    %v1790 = vpop.f32.mrf.mxu0
    %v1791 = vadd.f32 %v1578, %v1790
    %1792 = vdwg.mxu0
    %v1793 = vpack.c.bf16 %v1287, %v1285
    %v1794 = vpack.c.bf16 %v1288, %v1286
    %v1795 = vpack.c.bf16 %v1291, %v1289
    %v1796 = vpack.c.bf16 %v1292, %v1290
    %s1797 = scalar_lea.vmem [#allocation5], 1280
    %v1798 = vld [vmem:[%s1797] sm:$0xff]
    %v1799 = vld [vmem:[%s1797 + $0x8] sm:$0xff]
    %v1800 = vld [vmem:[%s1797 + $0x10] sm:$0xff]
    %v1801 = vld [vmem:[%s1797 + $0x18] sm:$0xff]
    %v1802 = vld [vmem:[%s1797 + $0x20] sm:$0xff]
    %v1803 = vld [vmem:[%s1797 + $0x28] sm:$0xff]
    %v1804 = vld [vmem:[%s1797 + $0x30] sm:$0xff]
    %v1805 = vld [vmem:[%s1797 + $0x38] sm:$0xff]
    %v1806 = vld [vmem:[%s1797 + $0x40] sm:$0xff]
    %v1807 = vld [vmem:[%s1797 + $0x48] sm:$0xff]
    %v1808 = vld [vmem:[%s1797 + $0x50] sm:$0xff]
    %v1809 = vld [vmem:[%s1797 + $0x58] sm:$0xff]
    %v1810 = vld [vmem:[%s1797 + $0x60] sm:$0xff]
    %v1811 = vld [vmem:[%s1797 + $0x68] sm:$0xff]
    %v1812 = vld [vmem:[%s1797 + $0x70] sm:$0xff]
    %v1813 = vld [vmem:[%s1797 + $0x78] sm:$0xff]
    %v1814 = vld [vmem:[%s1797 + $0x80] sm:$0xff]
    %v1815 = vld [vmem:[%s1797 + $0x88] sm:$0xff]
    %v1816 = vld [vmem:[%s1797 + $0x90] sm:$0xff]
    %v1817 = vld [vmem:[%s1797 + $0x98] sm:$0xff]
    %v1818 = vld [vmem:[%s1797 + $0xa0] sm:$0xff]
    %v1819 = vld [vmem:[%s1797 + $0xa8] sm:$0xff]
    %v1820 = vld [vmem:[%s1797 + $0xb0] sm:$0xff]
    %v1821 = vld [vmem:[%s1797 + $0xb8] sm:$0xff]
    %v1822 = vld [vmem:[%s1797 + $0xc0] sm:$0xff]
    %v1823 = vld [vmem:[%s1797 + $0xc8] sm:$0xff]
    %v1824 = vld [vmem:[%s1797 + $0xd0] sm:$0xff]
    %v1825 = vld [vmem:[%s1797 + $0xd8] sm:$0xff]
    %v1826 = vld [vmem:[%s1797 + $0xe0] sm:$0xff]
    %v1827 = vld [vmem:[%s1797 + $0xe8] sm:$0xff]
    %v1828 = vld [vmem:[%s1797 + $0xf0] sm:$0xff]
    %v1829 = vld [vmem:[%s1797 + $0xf8] sm:$0xff]
    %v1862 = vunpack.c.l.b16 %v1798
    %v1863 = vunpack.c.h.b16 %v1798
    %v1864 = vunpack.c.l.b16 %v1799
    %v1865 = vunpack.c.h.b16 %v1799
    %v1866 = vunpack.c.l.b16 %v1800
    %v1867 = vunpack.c.h.b16 %v1800
    %v1868 = vunpack.c.l.b16 %v1801
    %v1869 = vunpack.c.h.b16 %v1801
    %v1870 = vunpack.c.l.b16 %v1802
    %v1871 = vunpack.c.h.b16 %v1802
    %v1872 = vunpack.c.l.b16 %v1803
    %v1873 = vunpack.c.h.b16 %v1803
    %v1874 = vunpack.c.l.b16 %v1804
    %v1875 = vunpack.c.h.b16 %v1804
    %v1876 = vunpack.c.l.b16 %v1805
    %v1877 = vunpack.c.h.b16 %v1805
    %v1878 = vunpack.c.l.b16 %v1806
    %v1879 = vunpack.c.h.b16 %v1806
    %v1880 = vunpack.c.l.b16 %v1807
    %v1881 = vunpack.c.h.b16 %v1807
    %v1882 = vunpack.c.l.b16 %v1808
    %v1883 = vunpack.c.h.b16 %v1808
    %v1884 = vunpack.c.l.b16 %v1809
    %v1885 = vunpack.c.h.b16 %v1809
    %v1886 = vunpack.c.l.b16 %v1810
    %v1887 = vunpack.c.h.b16 %v1810
    %v1888 = vunpack.c.l.b16 %v1811
    %v1889 = vunpack.c.h.b16 %v1811
    %v1890 = vunpack.c.l.b16 %v1812
    %v1891 = vunpack.c.h.b16 %v1812
    %v1892 = vunpack.c.l.b16 %v1813
    %v1893 = vunpack.c.h.b16 %v1813
    %v1894 = vunpack.c.l.b16 %v1814
    %v1895 = vunpack.c.h.b16 %v1814
    %v1896 = vunpack.c.l.b16 %v1815
    %v1897 = vunpack.c.h.b16 %v1815
    %v1898 = vunpack.c.l.b16 %v1816
    %v1899 = vunpack.c.h.b16 %v1816
    %v1900 = vunpack.c.l.b16 %v1817
    %v1901 = vunpack.c.h.b16 %v1817
    %v1902 = vunpack.c.l.b16 %v1818
    %v1903 = vunpack.c.h.b16 %v1818
    %v1904 = vunpack.c.l.b16 %v1819
    %v1905 = vunpack.c.h.b16 %v1819
    %v1906 = vunpack.c.l.b16 %v1820
    %v1907 = vunpack.c.h.b16 %v1820
    %v1908 = vunpack.c.l.b16 %v1821
    %v1909 = vunpack.c.h.b16 %v1821
    %v1910 = vunpack.c.l.b16 %v1822
    %v1911 = vunpack.c.h.b16 %v1822
    %v1912 = vunpack.c.l.b16 %v1823
    %v1913 = vunpack.c.h.b16 %v1823
    %v1914 = vunpack.c.l.b16 %v1824
    %v1915 = vunpack.c.h.b16 %v1824
    %v1916 = vunpack.c.l.b16 %v1825
    %v1917 = vunpack.c.h.b16 %v1825
    %v1918 = vunpack.c.l.b16 %v1826
    %v1919 = vunpack.c.h.b16 %v1826
    %v1920 = vunpack.c.l.b16 %v1827
    %v1921 = vunpack.c.h.b16 %v1827
    %v1922 = vunpack.c.l.b16 %v1828
    %v1923 = vunpack.c.h.b16 %v1828
    %v1924 = vunpack.c.l.b16 %v1829
    %v1925 = vunpack.c.h.b16 %v1829
    %v1926 = vpack.c.b16 %v1864, %v1862
    %v1927 = vpack.c.b16 %v1865, %v1863
    %v1928 = vpack.c.b16 %v1868, %v1866
    %v1929 = vpack.c.b16 %v1869, %v1867
    %v1930 = vpack.c.b16 %v1872, %v1870
    %v1931 = vpack.c.b16 %v1873, %v1871
    %v1932 = vpack.c.b16 %v1876, %v1874
    %v1933 = vpack.c.b16 %v1877, %v1875
    %v1934 = vpack.c.b16 %v1880, %v1878
    %v1935 = vpack.c.b16 %v1881, %v1879
    %v1936 = vpack.c.b16 %v1884, %v1882
    %v1937 = vpack.c.b16 %v1885, %v1883
    %v1938 = vpack.c.b16 %v1888, %v1886
    %v1939 = vpack.c.b16 %v1889, %v1887
    %v1940 = vpack.c.b16 %v1892, %v1890
    %v1941 = vpack.c.b16 %v1893, %v1891
    %v1942 = vpack.c.b16 %v1896, %v1894
    %v1943 = vpack.c.b16 %v1897, %v1895
    %v1944 = vpack.c.b16 %v1900, %v1898
    %v1945 = vpack.c.b16 %v1901, %v1899
    %v1946 = vpack.c.b16 %v1904, %v1902
    %v1947 = vpack.c.b16 %v1905, %v1903
    %v1948 = vpack.c.b16 %v1908, %v1906
    %v1949 = vpack.c.b16 %v1909, %v1907
    %v1950 = vpack.c.b16 %v1912, %v1910
    %v1951 = vpack.c.b16 %v1913, %v1911
    %v1952 = vpack.c.b16 %v1916, %v1914
    %v1953 = vpack.c.b16 %v1917, %v1915
    %v1954 = vpack.c.b16 %v1920, %v1918
    %v1955 = vpack.c.b16 %v1921, %v1919
    %v1956 = vpack.c.b16 %v1924, %v1922
    %v1957 = vpack.c.b16 %v1925, %v1923
    %1990 = vmatprep.subr.bf16.mxu0 %v1941
    %1991 = vmatpush1.bf16.msra.mxu0 %v1940
    %1992 = vmatprep.subr.bf16.mxu0 %v1939
    %1993 = vmatpush1.bf16.msra.mxu0 %v1938
    %1994 = vmatprep.subr.bf16.mxu0 %v1937
    %1995 = vmatpush1.bf16.msra.mxu0 %v1936
    %1996 = vmatprep.subr.bf16.mxu0 %v1935
    %1997 = vmatpush1.bf16.msra.mxu0 %v1934
    %1998 = vmatprep.subr.bf16.mxu0 %v1933
    %1999 = vmatpush1.bf16.msra.mxu0 %v1932
    %2000 = vmatprep.subr.bf16.mxu0 %v1931
    %2001 = vmatpush1.bf16.msra.mxu0 %v1930
    %2002 = vmatprep.subr.bf16.mxu0 %v1929
    %2003 = vmatpush1.bf16.msra.mxu0 %v1928
    %2004 = vmatprep.subr.bf16.mxu0 %v1927
    %2005 = vmatpush1.bf16.msra.mxu0 %v1926
    %2006 = vmatprep.subr.bf16.mxu0 %v1957
    %2007 = vmatpush2.bf16.msra.mxu0 %v1956
    %2008 = vmatprep.subr.bf16.mxu0 %v1955
    %2009 = vmatpush2.bf16.msra.mxu0 %v1954
    %2010 = vmatprep.subr.bf16.mxu0 %v1953
    %2011 = vmatpush2.bf16.msra.mxu0 %v1952
    %2012 = vmatprep.subr.bf16.mxu0 %v1951
    %2013 = vmatpush2.bf16.msra.mxu0 %v1950
    %2014 = vmatprep.subr.bf16.mxu0 %v1949
    %2015 = vmatpush2.bf16.msra.mxu0 %v1948
    %2016 = vmatprep.subr.bf16.mxu0 %v1947
    %2017 = vmatpush2.bf16.msra.mxu0 %v1946
    %2018 = vmatprep.subr.bf16.mxu0 %v1945
    %2019 = vmatpush2.bf16.msra.mxu0 %v1944
    %2020 = vmatprep.subr.bf16.mxu0 %v1943
    %2021 = vmatpush2.bf16.msra.mxu0 %v1942
    %2022 = vmatprep.mubr.bf16.mxu0 %v1794
    %2023 = vmatmul.mubr.bf16.gmra.mxu0 %v1793
    %v2024 = vpop.f32.mrf.mxu0
    %v2025 = vadd.f32 0.0, %v2024
    %v2026 = vpop.f32.mrf.mxu0
    %v2027 = vadd.f32 0.0, %v2026
    %v2028 = vpop.f32.mrf.mxu0
    %v2029 = vadd.f32 0.0, %v2028
    %v2030 = vpop.f32.mrf.mxu0
    %v2031 = vadd.f32 0.0, %v2030
    %2032 = vmatprep.mubr.bf16.mxu0 %v1796
    %2033 = vmatmul.mubr.bf16.gmra.mxu0 %v1795
    %v2034 = vpop.f32.mrf.mxu0
    %v2035 = vadd.f32 0.0, %v2034
    %v2036 = vpop.f32.mrf.mxu0
    %v2037 = vadd.f32 0.0, %v2036
    %v2038 = vpop.f32.mrf.mxu0
    %v2039 = vadd.f32 0.0, %v2038
    %v2040 = vpop.f32.mrf.mxu0
    %v2041 = vadd.f32 0.0, %v2040
    %2042 = vdwg.mxu0
    %v2043 = vadd.f32 %v1775, %v2025
    %v2044 = vadd.f32 %v1777, %v2027
    %v2045 = vadd.f32 %v1779, %v2029
    %v2046 = vadd.f32 %v1781, %v2031
    %v2047 = vadd.f32 %v1785, %v2035
    %v2048 = vadd.f32 %v1787, %v2037
    %v2049 = vadd.f32 %v1789, %v2039
    %v2050 = vadd.f32 %v1791, %v2041
    %v2051 = vlaneseq
    %v2052 = vshrl.u32 %v2051, 7
    %v2053 = vsub.s32 2, %v2052
    %v2054 = vrot.slane %v54, %v2053
    %v2055 = vlaneseq
    %v2056 = vshrl.u32 %v2055, 7
    %v2057 = vsub.s32 2, %v2056
    %v2058 = vrot.slane %v55, %v2057
    %v2059 = vmul.f32 %v2043, %v2054
    %v2060 = vmul.f32 %v2044, %v2058
    %v2061 = vmul.f32 %v2045, %v2054
    %v2062 = vmul.f32 %v2046, %v2058
    %v2063 = vmul.f32 %v2047, %v2054
    %v2064 = vmul.f32 %v2048, %v2058
    %v2065 = vmul.f32 %v2049, %v2054
    %v2066 = vmul.f32 %v2050, %v2058
    %v2067 = vlaneseq
    %v2068 = vshrl.u32 %v2067, 7
    %v2069 = vsub.s32 3, %v2068
    %v2070 = vrot.slane %v54, %v2069
    %v2071 = vlaneseq
    %v2072 = vshrl.u32 %v2071, 7
    %v2073 = vsub.s32 3, %v2072
    %v2074 = vrot.slane %v55, %v2073
    %v2075 = vadd.f32 %v2059, %v2070
    %v2076 = vadd.f32 %v2060, %v2074
    %v2077 = vadd.f32 %v2061, %v2070
    %v2078 = vadd.f32 %v2062, %v2074
    %v2079 = vadd.f32 %v2063, %v2070
    %v2080 = vadd.f32 %v2064, %v2074
    %v2081 = vadd.f32 %v2065, %v2070
    %v2082 = vadd.f32 %v2066, %v2074
    %v2083 = vadd.f32 %v2075, %v46
    %v2084 = vadd.f32 %v2076, %v47
    %v2085 = vadd.f32 %v2077, %v48
    %v2086 = vadd.f32 %v2078, %v49
    %v2087 = vadd.f32 %v2079, %v50
    %v2088 = vadd.f32 %v2080, %v51
    %v2089 = vadd.f32 %v2081, %v52
    %v2090 = vadd.f32 %v2082, %v53
    %v2091 = vmul.f32 %v2083, %v976
    %v2092 = vmul.f32 %v2084, %v980
    %v2093 = vmul.f32 %v2085, %v976
    %v2094 = vmul.f32 %v2086, %v980
    %v2095 = vmul.f32 %v2087, %v976
    %v2096 = vmul.f32 %v2088, %v980
    %v2097 = vmul.f32 %v2089, %v976
    %v2098 = vmul.f32 %v2090, %v980
    %v2099 = vadd.f32 %v992, %v2091
    %v2100 = vadd.f32 %v996, %v2092
    %v2101 = vadd.f32 %v992, %v2093
    %v2102 = vadd.f32 %v996, %v2094
    %v2103 = vadd.f32 %v992, %v2095
    %v2104 = vadd.f32 %v996, %v2096
    %v2105 = vadd.f32 %v992, %v2097
    %v2106 = vadd.f32 %v996, %v2098
    %v2107 = vmul.f32 %v2083, %v2099
    %v2108 = vmul.f32 %v2084, %v2100
    %v2109 = vmul.f32 %v2085, %v2101
    %v2110 = vmul.f32 %v2086, %v2102
    %v2111 = vmul.f32 %v2087, %v2103
    %v2112 = vmul.f32 %v2088, %v2104
    %v2113 = vmul.f32 %v2089, %v2105
    %v2114 = vmul.f32 %v2090, %v2106
    %v2115 = vadd.f32 %v1016, %v2107
    %v2116 = vadd.f32 %v1020, %v2108
    %v2117 = vadd.f32 %v1016, %v2109
    %v2118 = vadd.f32 %v1020, %v2110
    %v2119 = vadd.f32 %v1016, %v2111
    %v2120 = vadd.f32 %v1020, %v2112
    %v2121 = vadd.f32 %v1016, %v2113
    %v2122 = vadd.f32 %v1020, %v2114
    %v2123 = vmul.f32 %v2083, %v2115
    %v2124 = vmul.f32 %v2084, %v2116
    %v2125 = vmul.f32 %v2085, %v2117
    %v2126 = vmul.f32 %v2086, %v2118
    %v2127 = vmul.f32 %v2087, %v2119
    %v2128 = vmul.f32 %v2088, %v2120
    %v2129 = vmul.f32 %v2089, %v2121
    %v2130 = vmul.f32 %v2090, %v2122
    %v2131 = vadd.f32 %v1040, %v2123
    %v2132 = vadd.f32 %v1044, %v2124
    %v2133 = vadd.f32 %v1040, %v2125
    %v2134 = vadd.f32 %v1044, %v2126
    %v2135 = vadd.f32 %v1040, %v2127
    %v2136 = vadd.f32 %v1044, %v2128
    %v2137 = vadd.f32 %v1040, %v2129
    %v2138 = vadd.f32 %v1044, %v2130
    %v2139 = vmul.f32 %v2083, %v2131
    %v2140 = vmul.f32 %v2084, %v2132
    %v2141 = vmul.f32 %v2085, %v2133
    %v2142 = vmul.f32 %v2086, %v2134
    %v2143 = vmul.f32 %v2087, %v2135
    %v2144 = vmul.f32 %v2088, %v2136
    %v2145 = vmul.f32 %v2089, %v2137
    %v2146 = vmul.f32 %v2090, %v2138
    %v2147 = vadd.f32 %v1064, %v2139
    %v2148 = vadd.f32 %v1068, %v2140
    %v2149 = vadd.f32 %v1064, %v2141
    %v2150 = vadd.f32 %v1068, %v2142
    %v2151 = vadd.f32 %v1064, %v2143
    %v2152 = vadd.f32 %v1068, %v2144
    %v2153 = vadd.f32 %v1064, %v2145
    %v2154 = vadd.f32 %v1068, %v2146
    %v2155 = vmul.f32 %v2083, %v2147
    %v2156 = vmul.f32 %v2084, %v2148
    %v2157 = vmul.f32 %v2085, %v2149
    %v2158 = vmul.f32 %v2086, %v2150
    %v2159 = vmul.f32 %v2087, %v2151
    %v2160 = vmul.f32 %v2088, %v2152
    %v2161 = vmul.f32 %v2089, %v2153
    %v2162 = vmul.f32 %v2090, %v2154
    %v2163 = vadd.f32 %v1088, %v2155
    %v2164 = vadd.f32 %v1092, %v2156
    %v2165 = vadd.f32 %v1088, %v2157
    %v2166 = vadd.f32 %v1092, %v2158
    %v2167 = vadd.f32 %v1088, %v2159
    %v2168 = vadd.f32 %v1092, %v2160
    %v2169 = vadd.f32 %v1088, %v2161
    %v2170 = vadd.f32 %v1092, %v2162
    %v2171 = vmul.f32 %v2083, %v1104
    %v2172 = vmul.f32 %v2084, %v1108
    %v2173 = vmul.f32 %v2085, %v1104
    %v2174 = vmul.f32 %v2086, %v1108
    %v2175 = vmul.f32 %v2087, %v1104
    %v2176 = vmul.f32 %v2088, %v1108
    %v2177 = vmul.f32 %v2089, %v1104
    %v2178 = vmul.f32 %v2090, %v1108
    %v2179 = vadd.f32 %v1120, %v2171
    %v2180 = vadd.f32 %v1124, %v2172
    %v2181 = vadd.f32 %v1120, %v2173
    %v2182 = vadd.f32 %v1124, %v2174
    %v2183 = vadd.f32 %v1120, %v2175
    %v2184 = vadd.f32 %v1124, %v2176
    %v2185 = vadd.f32 %v1120, %v2177
    %v2186 = vadd.f32 %v1124, %v2178
    %v2187 = vmul.f32 %v2083, %v2179
    %v2188 = vmul.f32 %v2084, %v2180
    %v2189 = vmul.f32 %v2085, %v2181
    %v2190 = vmul.f32 %v2086, %v2182
    %v2191 = vmul.f32 %v2087, %v2183
    %v2192 = vmul.f32 %v2088, %v2184
    %v2193 = vmul.f32 %v2089, %v2185
    %v2194 = vmul.f32 %v2090, %v2186
    %v2195 = vadd.f32 %v1144, %v2187
    %v2196 = vadd.f32 %v1148, %v2188
    %v2197 = vadd.f32 %v1144, %v2189
    %v2198 = vadd.f32 %v1148, %v2190
    %v2199 = vadd.f32 %v1144, %v2191
    %v2200 = vadd.f32 %v1148, %v2192
    %v2201 = vadd.f32 %v1144, %v2193
    %v2202 = vadd.f32 %v1148, %v2194
    %v2203 = vmul.f32 %v2083, %v2195
    %v2204 = vmul.f32 %v2084, %v2196
    %v2205 = vmul.f32 %v2085, %v2197
    %v2206 = vmul.f32 %v2086, %v2198
    %v2207 = vmul.f32 %v2087, %v2199
    %v2208 = vmul.f32 %v2088, %v2200
    %v2209 = vmul.f32 %v2089, %v2201
    %v2210 = vmul.f32 %v2090, %v2202
    %v2211 = vadd.f32 %v1168, %v2203
    %v2212 = vadd.f32 %v1172, %v2204
    %v2213 = vadd.f32 %v1168, %v2205
    %v2214 = vadd.f32 %v1172, %v2206
    %v2215 = vadd.f32 %v1168, %v2207
    %v2216 = vadd.f32 %v1172, %v2208
    %v2217 = vadd.f32 %v1168, %v2209
    %v2218 = vadd.f32 %v1172, %v2210
    %v2219 = vmul.f32 %v2083, %v2211
    %v2220 = vmul.f32 %v2084, %v2212
    %v2221 = vmul.f32 %v2085, %v2213
    %v2222 = vmul.f32 %v2086, %v2214
    %v2223 = vmul.f32 %v2087, %v2215
    %v2224 = vmul.f32 %v2088, %v2216
    %v2225 = vmul.f32 %v2089, %v2217
    %v2226 = vmul.f32 %v2090, %v2218
    %v2227 = vand.u32 2147483647, %v2219
    %v2228 = vand.u32 2147483647, %v2220
    %v2229 = vand.u32 2147483647, %v2221
    %v2230 = vand.u32 2147483647, %v2222
    %v2231 = vand.u32 2147483647, %v2223
    %v2232 = vand.u32 2147483647, %v2224
    %v2233 = vand.u32 2147483647, %v2225
    %v2234 = vand.u32 2147483647, %v2226
    %v2235 = vadd.f32 %v2227, 1.0
    %v2236 = vadd.f32 %v2228, 1.0
    %v2237 = vadd.f32 %v2229, 1.0
    %v2238 = vadd.f32 %v2230, 1.0
    %v2239 = vadd.f32 %v2231, 1.0
    %v2240 = vadd.f32 %v2232, 1.0
    %v2241 = vadd.f32 %v2233, 1.0
    %v2242 = vadd.f32 %v2234, 1.0
    %v2243 = vrcp.pop %v2235
    %v2244 = vrcp.pop %v2236
    %v2245 = vrcp.pop %v2237
    %v2246 = vrcp.pop %v2238
    %v2247 = vrcp.pop %v2239
    %v2248 = vrcp.pop %v2240
    %v2249 = vrcp.pop %v2241
    %v2250 = vrcp.pop %v2242
    %v2251 = vmul.f32 %v2163, %v2243
    %v2252 = vmul.f32 %v2164, %v2244
    %v2253 = vmul.f32 %v2165, %v2245
    %v2254 = vmul.f32 %v2166, %v2246
    %v2255 = vmul.f32 %v2167, %v2247
    %v2256 = vmul.f32 %v2168, %v2248
    %v2257 = vmul.f32 %v2169, %v2249
    %v2258 = vmul.f32 %v2170, %v2250
    %2259 = vst [vmem:[#allocation7] sm:$0xff] %v2251
    %2260 = vst [vmem:[#allocation7 + $0x8] sm:$0xff] %v2252
    %2261 = vst [vmem:[#allocation7 + $0x10] sm:$0xff] %v2253
    %2262 = vst [vmem:[#allocation7 + $0x18] sm:$0xff] %v2254
    %2263 = vst [vmem:[#allocation7 + $0x20] sm:$0xff] %v2255
    %2264 = vst [vmem:[#allocation7 + $0x28] sm:$0xff] %v2256
    %2265 = vst [vmem:[#allocation7 + $0x30] sm:$0xff] %v2257
    %2266 = vst [vmem:[#allocation7 + $0x38] sm:$0xff] %v2258
    // Predicated region
    $region26: #{tpu_custom_call.1} parent=1 // pred_check
      _
    $region27: #{tpu_custom_call.1} parent=1 // pred_check_branch
      %2268 = sbr.rel (0) target = $region29
    $region28: #{tpu_custom_call.1} parent=1 // pred_region
      %s2270 = ssub.s32 1024, 1024
      %2271 = vsyncadd [#allocation4], %s2270
      %s2272 = sshll.u32 [#allocation7], 4
      %s2273 = int_to_ptr.vmem [resolvable:$true] %s2272
      %2278 = dma.vmem_to_hbm [thread:$0]  %s2273, 1024, %s4, [#allocation4], 256, 256, 16
    $region29: #{tpu_custom_call.1} parent=1 // pred_fallthru
      _
    // Predicated region
    $region30: #{tpu_custom_call.1} parent=1 // pred_check
      _
    $region31: #{tpu_custom_call.1} parent=1 // pred_check_branch
      %2280 = sbr.rel (0) target = $region33
    $region32: #{tpu_custom_call.1} parent=1 // pred_region
      %2281 = dma.done [#allocation4], 1024
    $region33: #{tpu_custom_call.1} parent=1 // pred_fallthru
      _
    %2282 = vsyncpa [#allocation3], 1
    %2283 = vsyncpa [#allocation6], 1
    %2284 = vsyncpa [#allocation4], 1

</llo_original>
